<compile_context>
chip_gen: v5e
topology: v5e:2x2
jax: 0.10.0
libtpu: 0.0.40
codegen_flags: <defaults>
</compile_context>

<pallas_src>
import functools

import jax
import jax.numpy as jnp
from jax import lax
from jax.experimental import pallas as pl
from jax.experimental.pallas import tpu as pltpu

VMEM = pltpu.MemorySpace.VMEM
SMEM = pltpu.MemorySpace.SMEM

HIDDEN = 32       # semantic hidden_dim of the torch module
HPAD = 128        # lane-dense padded feature width (columns 32..127 are identically zero)
NEG_SLOPE = 0.01  # F.leaky_relu default used in GAT.message
BN_EPS = 1e-5


# ---------------------------------------------------------------------------
# The single fused kernel
#   node types (fixed order): P, A, C, R
#   GAT param rows: 0=('A','P'), 1=('C','P'), 2=('R','P')  [intra], 3=('P','A') [intra_mp]
# ---------------------------------------------------------------------------
def _cross_view_kernel(
    xP_ref, xA_ref, xC_ref, xR_ref,              # raw features per node type
    wP_ref, wA_ref, wC_ref, wR_ref,              # fc weights, pre-transposed [Fin, HPAD]
    fcb_ref,                                     # [4, HPAD] fc biases (P,A,C,R)
    fca_ref,                                     # [4] fc PReLU alphas        (SMEM)
    asrc_ref, adst_ref,                          # [4, HPAD] GAT att_src / att_dst
    gbias_ref, ggamma_ref, gbeta_ref,            # [4, HPAD] GAT bias / BN gamma / BN beta
    galpha_ref,                                  # [4] GAT PReLU alphas       (SMEM)
    adjAP_ref, adjCP_ref, adjRP_ref, adjPA_ref,  # dense adjacency [N_dst, N_src]
    mask_ref,                                    # [Np, 3] 1.0 at masked main nodes, per round
    loss_ref,                                    # (1,1) scalar output        (SMEM)
    *, num_masks):

    # ---- load small stacked parameter tables once ----
    fcb = fcb_ref[...]
    asrc = asrc_ref[...]
    adst = adst_ref[...]
    gbias = gbias_ref[...]
    ggamma = ggamma_ref[...]
    gbeta = gbeta_ref[...]
    masks = mask_ref[...]

    def prelu(y, a):
        return jnp.where(y >= 0.0, y, a * y)

    # ---- h[t] = PReLU( feat_drop( Linear(x_t) ) ), feat_drop = identity ----
    def fc_act(x_ref, w_ref, row):
        y = jnp.dot(x_ref[...], w_ref[...], preferred_element_type=jnp.float32)
        y = y + fcb[row:row + 1, :]
        return prelu(y, fca_ref[row])

    hP = fc_act(xP_ref, wP_ref, 0)
    hA = fc_act(xA_ref, wA_ref, 1)
    hC = fc_act(xC_ref, wC_ref, 2)
    hR = fc_act(xR_ref, wR_ref, 3)

    # ---- GAT (dense masked softmax) + BatchNorm(train) + PReLU ----------------
    # alpha_src : [1, Ns] row, alpha_dst : [Nd, 1] column (precomputed & reused).
    def attn_bn_act(xs, adj, i, alpha_src, alpha_dst):
        e = alpha_dst + alpha_src                                # [Nd, Ns]
        e = jnp.where(e >= 0.0, e, NEG_SLOPE * e)                # leaky_relu (f32 path)
        e = jnp.where(adj > 0.0, e, -1e30)                       # softmax only over edges
        m = jnp.max(e, axis=-1, keepdims=True)
        p = jnp.exp(e - m) * adj
        den = jnp.sum(p, axis=-1, keepdims=True)
        p = p / jnp.where(den == 0.0, 1.0, den)                  # att_drop = identity
        out = jnp.dot(p, xs, preferred_element_type=jnp.float32) + gbias[i:i + 1, :]
        # BatchNorm1d over dst nodes, training mode (biased variance, eps=1e-5)
        mu = jnp.mean(out, axis=0, keepdims=True)
        var = jnp.mean((out - mu) ** 2, axis=0, keepdims=True)
        y = (out - mu) * lax.rsqrt(var + BN_EPS) * ggamma[i:i + 1, :] + gbeta[i:i + 1, :]
        return prelu(y, galpha_ref[i])

    def a_src_row(xs, i):                                        # (att_src . x_src) as [1, Ns]
        return lax.dot_general(asrc[i:i + 1, :], xs, (((1,), (1,)), ((), ())),
                               preferred_element_type=jnp.float32)

    def a_dst_col(xd, i):                                        # (att_dst . x_dst) as [Nd, 1]
        return jnp.sum(xd * adst[i:i + 1, :], axis=-1, keepdims=True)

    # ---- meta-path pass: h['A'] <- PReLU(BN(GAT(h['P'], h['A']))) (param row 3) ----
    hA = attn_bn_act(hP, adjPA_ref[...], 3, a_src_row(hP, 3), a_dst_col(hA, 3))

    adjAP = adjAP_ref[...]
    adjCP = adjCP_ref[...]
    adjRP = adjRP_ref[...]

    # relation index -> (source features, adjacency [Np, Ns])
    rel_src = {0: (hA, adjAP), 1: (hC, adjCP), 2: (hR, adjRP)}

    # Shared work: the h1-side GATs use the UNMASKED hP as destination, so each of
    # the three relations is computed exactly once and reused across rounds.
    asrc_row = {}
    adstP_col = {}
    G = {}
    for i in (0, 1, 2):
        xs, adj = rel_src[i]
        asrc_row[i] = a_src_row(xs, i)
        adstP_col[i] = a_dst_col(hP, i)
        G[i] = attn_bn_act(xs, adj, i, asrc_row[i], adstP_col[i])

    # rounds: (h1 relation indices, sc relation index) — matches the torch forward
    rounds = (((0, 2), 1),   # schema_dict1=[A->P, R->P], sc=('C','P')
              ((0, 1), 2),   # schema_dict2=[A->P, C->P], sc=('R','P')
              ((1, 2), 0))   # schema_dict3=[C->P, R->P], sc=('A','P')

    total = jnp.float32(0.0)
    for r, (h1_idx, sc_idx) in enumerate(rounds):
        mcol = masks[:, r:r + 1]                                 # [Np, 1]
        keep = 1.0 - mcol

        h1 = G[h1_idx[0]] + G[h1_idx[1]]

        # "sc" pass uses masked main-node features as destination; masking zeroes
        # whole dst rows, so only alpha_dst changes: alpha_dst_masked = alpha_dst * keep.
        xs, adj = rel_src[sc_idx]
        e2 = attn_bn_act(xs, adj, sc_idx, asrc_row[sc_idx], adstP_col[sc_idx] * keep)

        # sce_loss (alpha=1) over the masked nodes, via the indicator column
        xn = e2 * lax.rsqrt(jnp.maximum(jnp.sum(e2 * e2, axis=-1, keepdims=True), 1e-24))
        yn = h1 * lax.rsqrt(jnp.maximum(jnp.sum(h1 * h1, axis=-1, keepdims=True), 1e-24))
        cos = jnp.sum(xn * yn, axis=-1, keepdims=True)           # [Np, 1]
        total = total + jnp.sum((1.0 - cos) * mcol) * (1.0 / float(num_masks[r]))

    loss_ref[0, 0] = total


# ---------------------------------------------------------------------------
# Parameter init (deterministic, synthetic) — stored pre-transposed / zero-padded
# ---------------------------------------------------------------------------
def init_params(key, hidden, feat_dims, hpad=HPAD):
    order = ["P", "A", "C", "R"]
    n_gat = 4  # rows 0..2 intra (A->P, C->P, R->P), row 3 intra_mp (P->A)

    kfc, kgat = jax.random.split(key)
    fckeys = jax.random.split(kfc, len(order))
    gkeys = jax.random.split(kgat, 2 * n_gat)

    fc_w = {}
    for i, t in enumerate(order):
        f = feat_dims[t]
        std = 1.414 * jnp.sqrt(2.0 / (f + hidden))               # xavier_normal, gain=1.414
        w = std * jax.random.normal(fckeys[i], (f, hidden), jnp.float32)   # [Fin, H] layout
        fc_w[t] = jnp.zeros((f, hpad), jnp.float32).at[:, :hidden].set(w)  # zero-pad lanes

    lim = float(jnp.sqrt(6.0 / (1 + hidden)))                    # glorot on (1, hidden)
    att_src = jnp.zeros((n_gat, hpad), jnp.float32)
    att_dst = jnp.zeros((n_gat, hpad), jnp.float32)
    for i in range(n_gat):
        att_src = att_src.at[i, :hidden].set(
            jax.random.uniform(gkeys[2 * i], (hidden,), jnp.float32, -lim, lim))
        att_dst = att_dst.at[i, :hidden].set(
            jax.random.uniform(gkeys[2 * i + 1], (hidden,), jnp.float32, -lim, lim))

    return dict(
        fc_w=fc_w,
        fc_b=jnp.zeros((len(order), hpad), jnp.float32),
        fc_a=0.25 * jnp.ones((len(order),), jnp.float32),
        att_src=att_src,
        att_dst=att_dst,
        gat_bias=jnp.zeros((n_gat, hpad), jnp.float32),
        bn_gamma=jnp.ones((n_gat, hpad), jnp.float32),
        bn_beta=jnp.zeros((n_gat, hpad), jnp.float32),
        gat_a=0.25 * jnp.ones((n_gat,), jnp.float32),
        enc_mask_token=jnp.zeros((1, hpad), jnp.float32),        # defined in torch, unused in forward
    )


# ---------------------------------------------------------------------------
# Forward: host builds the 3 random mask indicator columns, then ONE pallas_call
# ---------------------------------------------------------------------------
def cross_view_forward(params, data, key):
    x, adj = data["x"], data["adj"]
    Np = x["P"].shape[0]
    rates = (data["r1"], data["r2"], data["r3"])

    keys = jax.random.split(key, 3)
    cols, num_masks = [], []
    for k, rate in zip(keys, rates):
        n = int(rate * Np)                                       # static, like torch int(rate*N)
        num_masks.append(n)
        perm = jax.random.permutation(k, Np)
        cols.append(jnp.zeros((Np,), jnp.float32).at[perm[:n]].set(1.0))
    masks3 = jnp.stack(cols, axis=1)                             # [Np, 3]

    kernel = functools.partial(_cross_view_kernel, num_masks=tuple(num_masks))
    vspec = pl.BlockSpec(memory_space=VMEM)
    sspec = pl.BlockSpec(memory_space=SMEM)
    in_specs = [vspec] * 9 + [sspec] + [vspec] * 5 + [sspec] + [vspec] * 5

    loss = pl.pallas_call(
        kernel,
        out_shape=jax.ShapeDtypeStruct((1, 1), jnp.float32),
        in_specs=in_specs,
        out_specs=pl.BlockSpec(memory_space=SMEM),
    )(x["P"], x["A"], x["C"], x["R"],
      params["fc_w"]["P"], params["fc_w"]["A"], params["fc_w"]["C"], params["fc_w"]["R"],
      params["fc_b"], params["fc_a"],
      params["att_src"], params["att_dst"],
      params["gat_bias"], params["bn_gamma"], params["bn_beta"], params["gat_a"],
      adj[("A", "P")], adj[("C", "P")], adj[("R", "P")], adj[("P", "A")],
      masks3)
    return loss[0, 0]


# ---------------------------------------------------------------------------
if __name__ == "__main__":
    key = jax.random.PRNGKey(0)
    feat_dims = {"P": 24, "A": 16, "C": 12, "R": 20}
    num_nodes = {"P": 16, "A": 16, "C": 8, "R": 8}               # sublane(8)-aligned

    kp, kx, ka, kf = jax.random.split(key, 4)
    params = init_params(kp, HIDDEN, feat_dims)

    xkeys = jax.random.split(kx, 4)
    x = {t: jax.random.normal(xkeys[i], (num_nodes[t], feat_dims[t]), jnp.float32)
         for i, t in enumerate(["P", "A", "C", "R"])}

    # dense adjacency adj[(src,dst)] of shape [N_dst, N_src]; every dst node has >= 1 edge
    relations = [("A", "P"), ("C", "P"), ("R", "P"), ("P", "A")]
    akeys = jax.random.split(ka, len(relations))
    adj = {}
    for i, (src, dst) in enumerate(relations):
        a = jax.random.bernoulli(akeys[i], 0.4, (num_nodes[dst], num_nodes[src]))
        a = a.at[:, 0].set(True)
        adj[(src, dst)] = a.astype(jnp.float32)

    data = {"x": x, "adj": adj, "r1": 0.5, "r2": 0.5, "r3": 0.5}

    loss = cross_view_forward(params, data, kf)
    jax.block_until_ready(loss)
    assert jnp.isfinite(loss)
    print("KERNEL_OK")
</pallas_src>

<mosaic_0001>
module attributes {stable_mosaic.version = 11 : i64} {
  func.func @_cross_view_kernel(%arg0: memref<16x24xf32, #tpu.memory_space<vmem>>, %arg1: memref<16x16xf32, #tpu.memory_space<vmem>>, %arg2: memref<8x12xf32, #tpu.memory_space<vmem>>, %arg3: memref<8x20xf32, #tpu.memory_space<vmem>>, %arg4: memref<24x128xf32, #tpu.memory_space<vmem>>, %arg5: memref<16x128xf32, #tpu.memory_space<vmem>>, %arg6: memref<12x128xf32, #tpu.memory_space<vmem>>, %arg7: memref<20x128xf32, #tpu.memory_space<vmem>>, %arg8: memref<4x128xf32, #tpu.memory_space<vmem>>, %arg9: memref<4xf32, #tpu.memory_space<smem>>, %arg10: memref<4x128xf32, #tpu.memory_space<vmem>>, %arg11: memref<4x128xf32, #tpu.memory_space<vmem>>, %arg12: memref<4x128xf32, #tpu.memory_space<vmem>>, %arg13: memref<4x128xf32, #tpu.memory_space<vmem>>, %arg14: memref<4x128xf32, #tpu.memory_space<vmem>>, %arg15: memref<4xf32, #tpu.memory_space<smem>>, %arg16: memref<16x16xf32, #tpu.memory_space<vmem>>, %arg17: memref<16x8xf32, #tpu.memory_space<vmem>>, %arg18: memref<16x8xf32, #tpu.memory_space<vmem>>, %arg19: memref<16x16xf32, #tpu.memory_space<vmem>>, %arg20: memref<16x3xf32, #tpu.memory_space<vmem>>, %arg21: memref<1x1xf32, #tpu.memory_space<smem>>) attributes {dimension_semantics = [], scalar_prefetch = 0 : i64, scratch_operands = 0 : i64, tpu.core_type = #tpu.core_type<tc>} {
    %c0 = arith.constant 0 : index
    %c0_0 = arith.constant 0 : index
    %0 = vector.load %arg8[%c0, %c0_0] : memref<4x128xf32, #tpu.memory_space<vmem>>, vector<4x128xf32>
    %c0_1 = arith.constant 0 : index
    %c0_2 = arith.constant 0 : index
    %1 = vector.load %arg10[%c0_1, %c0_2] : memref<4x128xf32, #tpu.memory_space<vmem>>, vector<4x128xf32>
    %c0_3 = arith.constant 0 : index
    %c0_4 = arith.constant 0 : index
    %2 = vector.load %arg11[%c0_3, %c0_4] : memref<4x128xf32, #tpu.memory_space<vmem>>, vector<4x128xf32>
    %c0_5 = arith.constant 0 : index
    %c0_6 = arith.constant 0 : index
    %3 = vector.load %arg12[%c0_5, %c0_6] : memref<4x128xf32, #tpu.memory_space<vmem>>, vector<4x128xf32>
    %c0_7 = arith.constant 0 : index
    %c0_8 = arith.constant 0 : index
    %4 = vector.load %arg13[%c0_7, %c0_8] : memref<4x128xf32, #tpu.memory_space<vmem>>, vector<4x128xf32>
    %c0_9 = arith.constant 0 : index
    %c0_10 = arith.constant 0 : index
    %5 = vector.load %arg14[%c0_9, %c0_10] : memref<4x128xf32, #tpu.memory_space<vmem>>, vector<4x128xf32>
    %c0_11 = arith.constant 0 : index
    %c0_12 = arith.constant 0 : index
    %6 = vector.load %arg20[%c0_11, %c0_12] : memref<16x3xf32, #tpu.memory_space<vmem>>, vector<16x3xf32>
    %c0_13 = arith.constant 0 : index
    %c0_14 = arith.constant 0 : index
    %7 = vector.load %arg0[%c0_13, %c0_14] : memref<16x24xf32, #tpu.memory_space<vmem>>, vector<16x24xf32>
    %c0_15 = arith.constant 0 : index
    %c0_16 = arith.constant 0 : index
    %8 = vector.load %arg4[%c0_15, %c0_16] : memref<24x128xf32, #tpu.memory_space<vmem>>, vector<24x128xf32>
    %cst = arith.constant dense<0.000000e+00> : vector<16x128xf32>
    %9 = tpu.matmul %7, %8, %cst {dimension_numbers = #tpu.dot_dimension_numbers<[1], [0], [0], [1], [0, 0, 1, 1], [], []>} : vector<16x24xf32>, vector<24x128xf32>, vector<16x128xf32> -> vector<16x128xf32>
    %10 = vector.extract_strided_slice %0 {offsets = [0, 0], sizes = [1, 128], strides = [1, 1]} : vector<4x128xf32> to vector<1x128xf32>
    %11 = vector.broadcast %10 : vector<1x128xf32> to vector<16x128xf32>
    %12 = arith.addf %9, %11 : vector<16x128xf32>
    %c0_17 = arith.constant 0 : index
    %13 = memref.load %arg9[%c0_17] : memref<4xf32, #tpu.memory_space<smem>>
    %cst_18 = arith.constant 0.000000e+00 : f32
    %14 = vector.broadcast %cst_18 : f32 to vector<16x128xf32>
    %15 = arith.cmpf oge, %12, %14 : vector<16x128xf32>
    %16 = vector.broadcast %13 : f32 to vector<16x128xf32>
    %17 = arith.mulf %16, %12 : vector<16x128xf32>
    %18 = arith.select %15, %12, %17 : vector<16x128xi1>, vector<16x128xf32>
    %c0_19 = arith.constant 0 : index
    %c0_20 = arith.constant 0 : index
    %19 = vector.load %arg1[%c0_19, %c0_20] : memref<16x16xf32, #tpu.memory_space<vmem>>, vector<16x16xf32>
    %c0_21 = arith.constant 0 : index
    %c0_22 = arith.constant 0 : index
    %20 = vector.load %arg5[%c0_21, %c0_22] : memref<16x128xf32, #tpu.memory_space<vmem>>, vector<16x128xf32>
    %cst_23 = arith.constant dense<0.000000e+00> : vector<16x128xf32>
    %21 = tpu.matmul %19, %20, %cst_23 {dimension_numbers = #tpu.dot_dimension_numbers<[1], [0], [0], [1], [0, 0, 1, 1], [], []>} : vector<16x16xf32>, vector<16x128xf32>, vector<16x128xf32> -> vector<16x128xf32>
    %22 = vector.extract_strided_slice %0 {offsets = [1, 0], sizes = [1, 128], strides = [1, 1]} : vector<4x128xf32> to vector<1x128xf32>
    %23 = vector.broadcast %22 : vector<1x128xf32> to vector<16x128xf32>
    %24 = arith.addf %21, %23 : vector<16x128xf32>
    %c1 = arith.constant 1 : index
    %25 = memref.load %arg9[%c1] : memref<4xf32, #tpu.memory_space<smem>>
    %cst_24 = arith.constant 0.000000e+00 : f32
    %26 = vector.broadcast %cst_24 : f32 to vector<16x128xf32>
    %27 = arith.cmpf oge, %24, %26 : vector<16x128xf32>
    %28 = vector.broadcast %25 : f32 to vector<16x128xf32>
    %29 = arith.mulf %28, %24 : vector<16x128xf32>
    %30 = arith.select %27, %24, %29 : vector<16x128xi1>, vector<16x128xf32>
    %c0_25 = arith.constant 0 : index
    %c0_26 = arith.constant 0 : index
    %31 = vector.load %arg2[%c0_25, %c0_26] : memref<8x12xf32, #tpu.memory_space<vmem>>, vector<8x12xf32>
    %c0_27 = arith.constant 0 : index
    %c0_28 = arith.constant 0 : index
    %32 = vector.load %arg6[%c0_27, %c0_28] : memref<12x128xf32, #tpu.memory_space<vmem>>, vector<12x128xf32>
    %cst_29 = arith.constant dense<0.000000e+00> : vector<8x128xf32>
    %33 = tpu.matmul %31, %32, %cst_29 {dimension_numbers = #tpu.dot_dimension_numbers<[1], [0], [0], [1], [0, 0, 1, 1], [], []>} : vector<8x12xf32>, vector<12x128xf32>, vector<8x128xf32> -> vector<8x128xf32>
    %34 = vector.extract_strided_slice %0 {offsets = [2, 0], sizes = [1, 128], strides = [1, 1]} : vector<4x128xf32> to vector<1x128xf32>
    %35 = vector.broadcast %34 : vector<1x128xf32> to vector<8x128xf32>
    %36 = arith.addf %33, %35 : vector<8x128xf32>
    %c2 = arith.constant 2 : index
    %37 = memref.load %arg9[%c2] : memref<4xf32, #tpu.memory_space<smem>>
    %cst_30 = arith.constant 0.000000e+00 : f32
    %38 = vector.broadcast %cst_30 : f32 to vector<8x128xf32>
    %39 = arith.cmpf oge, %36, %38 : vector<8x128xf32>
    %40 = vector.broadcast %37 : f32 to vector<8x128xf32>
    %41 = arith.mulf %40, %36 : vector<8x128xf32>
    %42 = arith.select %39, %36, %41 : vector<8x128xi1>, vector<8x128xf32>
    %c0_31 = arith.constant 0 : index
    %c0_32 = arith.constant 0 : index
    %43 = vector.load %arg3[%c0_31, %c0_32] : memref<8x20xf32, #tpu.memory_space<vmem>>, vector<8x20xf32>
    %c0_33 = arith.constant 0 : index
    %c0_34 = arith.constant 0 : index
    %44 = vector.load %arg7[%c0_33, %c0_34] : memref<20x128xf32, #tpu.memory_space<vmem>>, vector<20x128xf32>
    %cst_35 = arith.constant dense<0.000000e+00> : vector<8x128xf32>
    %45 = tpu.matmul %43, %44, %cst_35 {dimension_numbers = #tpu.dot_dimension_numbers<[1], [0], [0], [1], [0, 0, 1, 1], [], []>} : vector<8x20xf32>, vector<20x128xf32>, vector<8x128xf32> -> vector<8x128xf32>
    %46 = vector.extract_strided_slice %0 {offsets = [3, 0], sizes = [1, 128], strides = [1, 1]} : vector<4x128xf32> to vector<1x128xf32>
    %47 = vector.broadcast %46 : vector<1x128xf32> to vector<8x128xf32>
    %48 = arith.addf %45, %47 : vector<8x128xf32>
    %c3 = arith.constant 3 : index
    %49 = memref.load %arg9[%c3] : memref<4xf32, #tpu.memory_space<smem>>
    %cst_36 = arith.constant 0.000000e+00 : f32
    %50 = vector.broadcast %cst_36 : f32 to vector<8x128xf32>
    %51 = arith.cmpf oge, %48, %50 : vector<8x128xf32>
    %52 = vector.broadcast %49 : f32 to vector<8x128xf32>
    %53 = arith.mulf %52, %48 : vector<8x128xf32>
    %54 = arith.select %51, %48, %53 : vector<8x128xi1>, vector<8x128xf32>
    %c0_37 = arith.constant 0 : index
    %c0_38 = arith.constant 0 : index
    %55 = vector.load %arg19[%c0_37, %c0_38] : memref<16x16xf32, #tpu.memory_space<vmem>>, vector<16x16xf32>
    %56 = vector.extract_strided_slice %1 {offsets = [3, 0], sizes = [1, 128], strides = [1, 1]} : vector<4x128xf32> to vector<1x128xf32>
    %cst_39 = arith.constant dense<0.000000e+00> : vector<1x16xf32>
    %57 = tpu.matmul %56, %18, %cst_39 {dimension_numbers = #tpu.dot_dimension_numbers<[1], [1], [0], [0], [0, 0, 1, 0], [], []>} : vector<1x128xf32>, vector<16x128xf32>, vector<1x16xf32> -> vector<1x16xf32>
    %58 = vector.extract_strided_slice %2 {offsets = [3, 0], sizes = [1, 128], strides = [1, 1]} : vector<4x128xf32> to vector<1x128xf32>
    %59 = vector.broadcast %58 : vector<1x128xf32> to vector<16x128xf32>
    %60 = arith.mulf %30, %59 : vector<16x128xf32>
    %cst_40 = arith.constant dense<0.000000e+00> : vector<16xf32>
    %61 = vector.multi_reduction <add>, %60, %cst_40 [1] : vector<16x128xf32> to vector<16xf32>
    %62 = vector.shape_cast %61 : vector<16xf32> to vector<16x1xf32>
    %63 = vector.broadcast %62 : vector<16x1xf32> to vector<16x16xf32>
    %64 = vector.broadcast %57 : vector<1x16xf32> to vector<16x16xf32>
    %65 = arith.addf %63, %64 : vector<16x16xf32>
    %cst_41 = arith.constant 0.000000e+00 : f32
    %66 = vector.broadcast %cst_41 : f32 to vector<16x16xf32>
    %67 = arith.cmpf oge, %65, %66 : vector<16x16xf32>
    %cst_42 = arith.constant 0.00999999977 : f32
    %68 = vector.broadcast %cst_42 : f32 to vector<16x16xf32>
    %69 = arith.mulf %68, %65 : vector<16x16xf32>
    %70 = arith.select %67, %65, %69 : vector<16x16xi1>, vector<16x16xf32>
    %cst_43 = arith.constant 0.000000e+00 : f32
    %71 = vector.broadcast %cst_43 : f32 to vector<16x16xf32>
    %72 = arith.cmpf ogt, %55, %71 : vector<16x16xf32>
    %cst_44 = arith.constant -1.000000e+30 : f32
    %73 = vector.broadcast %cst_44 : f32 to vector<16x16xf32>
    %74 = arith.select %72, %70, %73 : vector<16x16xi1>, vector<16x16xf32>
    %cst_45 = arith.constant dense<0xFF800000> : vector<16xf32>
    %75 = vector.multi_reduction <maximumf>, %74, %cst_45 [1] : vector<16x16xf32> to vector<16xf32>
    %76 = vector.shape_cast %75 : vector<16xf32> to vector<16x1xf32>
    %77 = vector.broadcast %76 : vector<16x1xf32> to vector<16x16xf32>
    %78 = arith.subf %74, %77 : vector<16x16xf32>
    %79 = math.exp %78 : vector<16x16xf32>
    %80 = arith.mulf %79, %55 : vector<16x16xf32>
    %cst_46 = arith.constant dense<0.000000e+00> : vector<16xf32>
    %81 = vector.multi_reduction <add>, %80, %cst_46 [1] : vector<16x16xf32> to vector<16xf32>
    %82 = vector.shape_cast %81 : vector<16xf32> to vector<16x1xf32>
    %cst_47 = arith.constant 0.000000e+00 : f32
    %83 = vector.broadcast %cst_47 : f32 to vector<16x1xf32>
    %84 = arith.cmpf oeq, %82, %83 : vector<16x1xf32>
    %cst_48 = arith.constant 1.000000e+00 : f32
    %85 = vector.broadcast %cst_48 : f32 to vector<16x1xf32>
    %86 = arith.select %84, %85, %82 : vector<16x1xi1>, vector<16x1xf32>
    %87 = vector.broadcast %86 : vector<16x1xf32> to vector<16x16xf32>
    %88 = arith.divf %80, %87 : vector<16x16xf32>
    %cst_49 = arith.constant dense<0.000000e+00> : vector<16x128xf32>
    %89 = tpu.matmul %88, %18, %cst_49 {dimension_numbers = #tpu.dot_dimension_numbers<[1], [0], [0], [1], [0, 0, 1, 1], [], []>} : vector<16x16xf32>, vector<16x128xf32>, vector<16x128xf32> -> vector<16x128xf32>
    %90 = vector.extract_strided_slice %3 {offsets = [3, 0], sizes = [1, 128], strides = [1, 1]} : vector<4x128xf32> to vector<1x128xf32>
    %91 = vector.broadcast %90 : vector<1x128xf32> to vector<16x128xf32>
    %92 = arith.addf %89, %91 : vector<16x128xf32>
    %cst_50 = arith.constant dense<0.000000e+00> : vector<128xf32>
    %93 = vector.multi_reduction <add>, %92, %cst_50 [0] : vector<16x128xf32> to vector<128xf32>
    %94 = vector.shape_cast %93 : vector<128xf32> to vector<1x128xf32>
    %cst_51 = arith.constant 1.600000e+01 : f32
    %95 = vector.broadcast %cst_51 : f32 to vector<1x128xf32>
    %96 = arith.divf %94, %95 : vector<1x128xf32>
    %97 = vector.broadcast %96 : vector<1x128xf32> to vector<16x128xf32>
    %98 = arith.subf %92, %97 : vector<16x128xf32>
    %99 = arith.mulf %98, %98 : vector<16x128xf32>
    %cst_52 = arith.constant dense<0.000000e+00> : vector<128xf32>
    %100 = vector.multi_reduction <add>, %99, %cst_52 [0] : vector<16x128xf32> to vector<128xf32>
    %101 = vector.shape_cast %100 : vector<128xf32> to vector<1x128xf32>
    %cst_53 = arith.constant 1.600000e+01 : f32
    %102 = vector.broadcast %cst_53 : f32 to vector<1x128xf32>
    %103 = arith.divf %101, %102 : vector<1x128xf32>
    %104 = vector.broadcast %96 : vector<1x128xf32> to vector<16x128xf32>
    %105 = arith.subf %92, %104 : vector<16x128xf32>
    %cst_54 = arith.constant 9.99999974E-6 : f32
    %106 = vector.broadcast %cst_54 : f32 to vector<1x128xf32>
    %107 = arith.addf %103, %106 : vector<1x128xf32>
    %108 = math.rsqrt %107 : vector<1x128xf32>
    %109 = vector.broadcast %108 : vector<1x128xf32> to vector<16x128xf32>
    %110 = arith.mulf %105, %109 : vector<16x128xf32>
    %111 = vector.extract_strided_slice %4 {offsets = [3, 0], sizes = [1, 128], strides = [1, 1]} : vector<4x128xf32> to vector<1x128xf32>
    %112 = vector.broadcast %111 : vector<1x128xf32> to vector<16x128xf32>
    %113 = arith.mulf %110, %112 : vector<16x128xf32>
    %114 = vector.extract_strided_slice %5 {offsets = [3, 0], sizes = [1, 128], strides = [1, 1]} : vector<4x128xf32> to vector<1x128xf32>
    %115 = vector.broadcast %114 : vector<1x128xf32> to vector<16x128xf32>
    %116 = arith.addf %113, %115 : vector<16x128xf32>
    %c3_55 = arith.constant 3 : index
    %117 = memref.load %arg15[%c3_55] : memref<4xf32, #tpu.memory_space<smem>>
    %cst_56 = arith.constant 0.000000e+00 : f32
    %118 = vector.broadcast %cst_56 : f32 to vector<16x128xf32>
    %119 = arith.cmpf oge, %116, %118 : vector<16x128xf32>
    %120 = vector.broadcast %117 : f32 to vector<16x128xf32>
    %121 = arith.mulf %120, %116 : vector<16x128xf32>
    %122 = arith.select %119, %116, %121 : vector<16x128xi1>, vector<16x128xf32>
    %c0_57 = arith.constant 0 : index
    %c0_58 = arith.constant 0 : index
    %123 = vector.load %arg16[%c0_57, %c0_58] : memref<16x16xf32, #tpu.memory_space<vmem>>, vector<16x16xf32>
    %c0_59 = arith.constant 0 : index
    %c0_60 = arith.constant 0 : index
    %124 = vector.load %arg17[%c0_59, %c0_60] : memref<16x8xf32, #tpu.memory_space<vmem>>, vector<16x8xf32>
    %c0_61 = arith.constant 0 : index
    %c0_62 = arith.constant 0 : index
    %125 = vector.load %arg18[%c0_61, %c0_62] : memref<16x8xf32, #tpu.memory_space<vmem>>, vector<16x8xf32>
    %126 = vector.extract_strided_slice %1 {offsets = [0, 0], sizes = [1, 128], strides = [1, 1]} : vector<4x128xf32> to vector<1x128xf32>
    %cst_63 = arith.constant dense<0.000000e+00> : vector<1x16xf32>
    %127 = tpu.matmul %126, %122, %cst_63 {dimension_numbers = #tpu.dot_dimension_numbers<[1], [1], [0], [0], [0, 0, 1, 0], [], []>} : vector<1x128xf32>, vector<16x128xf32>, vector<1x16xf32> -> vector<1x16xf32>
    %128 = vector.extract_strided_slice %2 {offsets = [0, 0], sizes = [1, 128], strides = [1, 1]} : vector<4x128xf32> to vector<1x128xf32>
    %129 = vector.broadcast %128 : vector<1x128xf32> to vector<16x128xf32>
    %130 = arith.mulf %18, %129 : vector<16x128xf32>
    %cst_64 = arith.constant dense<0.000000e+00> : vector<16xf32>
    %131 = vector.multi_reduction <add>, %130, %cst_64 [1] : vector<16x128xf32> to vector<16xf32>
    %132 = vector.shape_cast %131 : vector<16xf32> to vector<16x1xf32>
    %133 = vector.broadcast %132 : vector<16x1xf32> to vector<16x16xf32>
    %134 = vector.broadcast %127 : vector<1x16xf32> to vector<16x16xf32>
    %135 = arith.addf %133, %134 : vector<16x16xf32>
    %cst_65 = arith.constant 0.000000e+00 : f32
    %136 = vector.broadcast %cst_65 : f32 to vector<16x16xf32>
    %137 = arith.cmpf oge, %135, %136 : vector<16x16xf32>
    %cst_66 = arith.constant 0.00999999977 : f32
    %138 = vector.broadcast %cst_66 : f32 to vector<16x16xf32>
    %139 = arith.mulf %138, %135 : vector<16x16xf32>
    %140 = arith.select %137, %135, %139 : vector<16x16xi1>, vector<16x16xf32>
    %cst_67 = arith.constant 0.000000e+00 : f32
    %141 = vector.broadcast %cst_67 : f32 to vector<16x16xf32>
    %142 = arith.cmpf ogt, %123, %141 : vector<16x16xf32>
    %cst_68 = arith.constant -1.000000e+30 : f32
    %143 = vector.broadcast %cst_68 : f32 to vector<16x16xf32>
    %144 = arith.select %142, %140, %143 : vector<16x16xi1>, vector<16x16xf32>
    %cst_69 = arith.constant dense<0xFF800000> : vector<16xf32>
    %145 = vector.multi_reduction <maximumf>, %144, %cst_69 [1] : vector<16x16xf32> to vector<16xf32>
    %146 = vector.shape_cast %145 : vector<16xf32> to vector<16x1xf32>
    %147 = vector.broadcast %146 : vector<16x1xf32> to vector<16x16xf32>
    %148 = arith.subf %144, %147 : vector<16x16xf32>
    %149 = math.exp %148 : vector<16x16xf32>
    %150 = arith.mulf %149, %123 : vector<16x16xf32>
    %cst_70 = arith.constant dense<0.000000e+00> : vector<16xf32>
    %151 = vector.multi_reduction <add>, %150, %cst_70 [1] : vector<16x16xf32> to vector<16xf32>
    %152 = vector.shape_cast %151 : vector<16xf32> to vector<16x1xf32>
    %cst_71 = arith.constant 0.000000e+00 : f32
    %153 = vector.broadcast %cst_71 : f32 to vector<16x1xf32>
    %154 = arith.cmpf oeq, %152, %153 : vector<16x1xf32>
    %cst_72 = arith.constant 1.000000e+00 : f32
    %155 = vector.broadcast %cst_72 : f32 to vector<16x1xf32>
    %156 = arith.select %154, %155, %152 : vector<16x1xi1>, vector<16x1xf32>
    %157 = vector.broadcast %156 : vector<16x1xf32> to vector<16x16xf32>
    %158 = arith.divf %150, %157 : vector<16x16xf32>
    %cst_73 = arith.constant dense<0.000000e+00> : vector<16x128xf32>
    %159 = tpu.matmul %158, %122, %cst_73 {dimension_numbers = #tpu.dot_dimension_numbers<[1], [0], [0], [1], [0, 0, 1, 1], [], []>} : vector<16x16xf32>, vector<16x128xf32>, vector<16x128xf32> -> vector<16x128xf32>
    %160 = vector.extract_strided_slice %3 {offsets = [0, 0], sizes = [1, 128], strides = [1, 1]} : vector<4x128xf32> to vector<1x128xf32>
    %161 = vector.broadcast %160 : vector<1x128xf32> to vector<16x128xf32>
    %162 = arith.addf %159, %161 : vector<16x128xf32>
    %cst_74 = arith.constant dense<0.000000e+00> : vector<128xf32>
    %163 = vector.multi_reduction <add>, %162, %cst_74 [0] : vector<16x128xf32> to vector<128xf32>
    %164 = vector.shape_cast %163 : vector<128xf32> to vector<1x128xf32>
    %cst_75 = arith.constant 1.600000e+01 : f32
    %165 = vector.broadcast %cst_75 : f32 to vector<1x128xf32>
    %166 = arith.divf %164, %165 : vector<1x128xf32>
    %167 = vector.broadcast %166 : vector<1x128xf32> to vector<16x128xf32>
    %168 = arith.subf %162, %167 : vector<16x128xf32>
    %169 = arith.mulf %168, %168 : vector<16x128xf32>
    %cst_76 = arith.constant dense<0.000000e+00> : vector<128xf32>
    %170 = vector.multi_reduction <add>, %169, %cst_76 [0] : vector<16x128xf32> to vector<128xf32>
    %171 = vector.shape_cast %170 : vector<128xf32> to vector<1x128xf32>
    %cst_77 = arith.constant 1.600000e+01 : f32
    %172 = vector.broadcast %cst_77 : f32 to vector<1x128xf32>
    %173 = arith.divf %171, %172 : vector<1x128xf32>
    %174 = vector.broadcast %166 : vector<1x128xf32> to vector<16x128xf32>
    %175 = arith.subf %162, %174 : vector<16x128xf32>
    %cst_78 = arith.constant 9.99999974E-6 : f32
    %176 = vector.broadcast %cst_78 : f32 to vector<1x128xf32>
    %177 = arith.addf %173, %176 : vector<1x128xf32>
    %178 = math.rsqrt %177 : vector<1x128xf32>
    %179 = vector.broadcast %178 : vector<1x128xf32> to vector<16x128xf32>
    %180 = arith.mulf %175, %179 : vector<16x128xf32>
    %181 = vector.extract_strided_slice %4 {offsets = [0, 0], sizes = [1, 128], strides = [1, 1]} : vector<4x128xf32> to vector<1x128xf32>
    %182 = vector.broadcast %181 : vector<1x128xf32> to vector<16x128xf32>
    %183 = arith.mulf %180, %182 : vector<16x128xf32>
    %184 = vector.extract_strided_slice %5 {offsets = [0, 0], sizes = [1, 128], strides = [1, 1]} : vector<4x128xf32> to vector<1x128xf32>
    %185 = vector.broadcast %184 : vector<1x128xf32> to vector<16x128xf32>
    %186 = arith.addf %183, %185 : vector<16x128xf32>
    %c0_79 = arith.constant 0 : index
    %187 = memref.load %arg15[%c0_79] : memref<4xf32, #tpu.memory_space<smem>>
    %cst_80 = arith.constant 0.000000e+00 : f32
    %188 = vector.broadcast %cst_80 : f32 to vector<16x128xf32>
    %189 = arith.cmpf oge, %186, %188 : vector<16x128xf32>
    %190 = vector.broadcast %187 : f32 to vector<16x128xf32>
    %191 = arith.mulf %190, %186 : vector<16x128xf32>
    %192 = arith.select %189, %186, %191 : vector<16x128xi1>, vector<16x128xf32>
    %193 = vector.extract_strided_slice %1 {offsets = [1, 0], sizes = [1, 128], strides = [1, 1]} : vector<4x128xf32> to vector<1x128xf32>
    %cst_81 = arith.constant dense<0.000000e+00> : vector<1x8xf32>
    %194 = tpu.matmul %193, %42, %cst_81 {dimension_numbers = #tpu.dot_dimension_numbers<[1], [1], [0], [0], [0, 0, 1, 0], [], []>} : vector<1x128xf32>, vector<8x128xf32>, vector<1x8xf32> -> vector<1x8xf32>
    %195 = vector.extract_strided_slice %2 {offsets = [1, 0], sizes = [1, 128], strides = [1, 1]} : vector<4x128xf32> to vector<1x128xf32>
    %196 = vector.broadcast %195 : vector<1x128xf32> to vector<16x128xf32>
    %197 = arith.mulf %18, %196 : vector<16x128xf32>
    %cst_82 = arith.constant dense<0.000000e+00> : vector<16xf32>
    %198 = vector.multi_reduction <add>, %197, %cst_82 [1] : vector<16x128xf32> to vector<16xf32>
    %199 = vector.shape_cast %198 : vector<16xf32> to vector<16x1xf32>
    %200 = vector.broadcast %199 : vector<16x1xf32> to vector<16x8xf32>
    %201 = vector.broadcast %194 : vector<1x8xf32> to vector<16x8xf32>
    %202 = arith.addf %200, %201 : vector<16x8xf32>
    %cst_83 = arith.constant 0.000000e+00 : f32
    %203 = vector.broadcast %cst_83 : f32 to vector<16x8xf32>
    %204 = arith.cmpf oge, %202, %203 : vector<16x8xf32>
    %cst_84 = arith.constant 0.00999999977 : f32
    %205 = vector.broadcast %cst_84 : f32 to vector<16x8xf32>
    %206 = arith.mulf %205, %202 : vector<16x8xf32>
    %207 = arith.select %204, %202, %206 : vector<16x8xi1>, vector<16x8xf32>
    %cst_85 = arith.constant 0.000000e+00 : f32
    %208 = vector.broadcast %cst_85 : f32 to vector<16x8xf32>
    %209 = arith.cmpf ogt, %124, %208 : vector<16x8xf32>
    %cst_86 = arith.constant -1.000000e+30 : f32
    %210 = vector.broadcast %cst_86 : f32 to vector<16x8xf32>
    %211 = arith.select %209, %207, %210 : vector<16x8xi1>, vector<16x8xf32>
    %cst_87 = arith.constant dense<0xFF800000> : vector<16xf32>
    %212 = vector.multi_reduction <maximumf>, %211, %cst_87 [1] : vector<16x8xf32> to vector<16xf32>
    %213 = vector.shape_cast %212 : vector<16xf32> to vector<16x1xf32>
    %214 = vector.broadcast %213 : vector<16x1xf32> to vector<16x8xf32>
    %215 = arith.subf %211, %214 : vector<16x8xf32>
    %216 = math.exp %215 : vector<16x8xf32>
    %217 = arith.mulf %216, %124 : vector<16x8xf32>
    %cst_88 = arith.constant dense<0.000000e+00> : vector<16xf32>
    %218 = vector.multi_reduction <add>, %217, %cst_88 [1] : vector<16x8xf32> to vector<16xf32>
    %219 = vector.shape_cast %218 : vector<16xf32> to vector<16x1xf32>
    %cst_89 = arith.constant 0.000000e+00 : f32
    %220 = vector.broadcast %cst_89 : f32 to vector<16x1xf32>
    %221 = arith.cmpf oeq, %219, %220 : vector<16x1xf32>
    %cst_90 = arith.constant 1.000000e+00 : f32
    %222 = vector.broadcast %cst_90 : f32 to vector<16x1xf32>
    %223 = arith.select %221, %222, %219 : vector<16x1xi1>, vector<16x1xf32>
    %224 = vector.broadcast %223 : vector<16x1xf32> to vector<16x8xf32>
    %225 = arith.divf %217, %224 : vector<16x8xf32>
    %cst_91 = arith.constant dense<0.000000e+00> : vector<16x128xf32>
    %226 = tpu.matmul %225, %42, %cst_91 {dimension_numbers = #tpu.dot_dimension_numbers<[1], [0], [0], [1], [0, 0, 1, 1], [], []>} : vector<16x8xf32>, vector<8x128xf32>, vector<16x128xf32> -> vector<16x128xf32>
    %227 = vector.extract_strided_slice %3 {offsets = [1, 0], sizes = [1, 128], strides = [1, 1]} : vector<4x128xf32> to vector<1x128xf32>
    %228 = vector.broadcast %227 : vector<1x128xf32> to vector<16x128xf32>
    %229 = arith.addf %226, %228 : vector<16x128xf32>
    %cst_92 = arith.constant dense<0.000000e+00> : vector<128xf32>
    %230 = vector.multi_reduction <add>, %229, %cst_92 [0] : vector<16x128xf32> to vector<128xf32>
    %231 = vector.shape_cast %230 : vector<128xf32> to vector<1x128xf32>
    %cst_93 = arith.constant 1.600000e+01 : f32
    %232 = vector.broadcast %cst_93 : f32 to vector<1x128xf32>
    %233 = arith.divf %231, %232 : vector<1x128xf32>
    %234 = vector.broadcast %233 : vector<1x128xf32> to vector<16x128xf32>
    %235 = arith.subf %229, %234 : vector<16x128xf32>
    %236 = arith.mulf %235, %235 : vector<16x128xf32>
    %cst_94 = arith.constant dense<0.000000e+00> : vector<128xf32>
    %237 = vector.multi_reduction <add>, %236, %cst_94 [0] : vector<16x128xf32> to vector<128xf32>
    %238 = vector.shape_cast %237 : vector<128xf32> to vector<1x128xf32>
    %cst_95 = arith.constant 1.600000e+01 : f32
    %239 = vector.broadcast %cst_95 : f32 to vector<1x128xf32>
    %240 = arith.divf %238, %239 : vector<1x128xf32>
    %241 = vector.broadcast %233 : vector<1x128xf32> to vector<16x128xf32>
    %242 = arith.subf %229, %241 : vector<16x128xf32>
    %cst_96 = arith.constant 9.99999974E-6 : f32
    %243 = vector.broadcast %cst_96 : f32 to vector<1x128xf32>
    %244 = arith.addf %240, %243 : vector<1x128xf32>
    %245 = math.rsqrt %244 : vector<1x128xf32>
    %246 = vector.broadcast %245 : vector<1x128xf32> to vector<16x128xf32>
    %247 = arith.mulf %242, %246 : vector<16x128xf32>
    %248 = vector.extract_strided_slice %4 {offsets = [1, 0], sizes = [1, 128], strides = [1, 1]} : vector<4x128xf32> to vector<1x128xf32>
    %249 = vector.broadcast %248 : vector<1x128xf32> to vector<16x128xf32>
    %250 = arith.mulf %247, %249 : vector<16x128xf32>
    %251 = vector.extract_strided_slice %5 {offsets = [1, 0], sizes = [1, 128], strides = [1, 1]} : vector<4x128xf32> to vector<1x128xf32>
    %252 = vector.broadcast %251 : vector<1x128xf32> to vector<16x128xf32>
    %253 = arith.addf %250, %252 : vector<16x128xf32>
    %c1_97 = arith.constant 1 : index
    %254 = memref.load %arg15[%c1_97] : memref<4xf32, #tpu.memory_space<smem>>
    %cst_98 = arith.constant 0.000000e+00 : f32
    %255 = vector.broadcast %cst_98 : f32 to vector<16x128xf32>
    %256 = arith.cmpf oge, %253, %255 : vector<16x128xf32>
    %257 = vector.broadcast %254 : f32 to vector<16x128xf32>
    %258 = arith.mulf %257, %253 : vector<16x128xf32>
    %259 = arith.select %256, %253, %258 : vector<16x128xi1>, vector<16x128xf32>
    %260 = vector.extract_strided_slice %1 {offsets = [2, 0], sizes = [1, 128], strides = [1, 1]} : vector<4x128xf32> to vector<1x128xf32>
    %cst_99 = arith.constant dense<0.000000e+00> : vector<1x8xf32>
    %261 = tpu.matmul %260, %54, %cst_99 {dimension_numbers = #tpu.dot_dimension_numbers<[1], [1], [0], [0], [0, 0, 1, 0], [], []>} : vector<1x128xf32>, vector<8x128xf32>, vector<1x8xf32> -> vector<1x8xf32>
    %262 = vector.extract_strided_slice %2 {offsets = [2, 0], sizes = [1, 128], strides = [1, 1]} : vector<4x128xf32> to vector<1x128xf32>
    %263 = vector.broadcast %262 : vector<1x128xf32> to vector<16x128xf32>
    %264 = arith.mulf %18, %263 : vector<16x128xf32>
    %cst_100 = arith.constant dense<0.000000e+00> : vector<16xf32>
    %265 = vector.multi_reduction <add>, %264, %cst_100 [1] : vector<16x128xf32> to vector<16xf32>
    %266 = vector.shape_cast %265 : vector<16xf32> to vector<16x1xf32>
    %267 = vector.broadcast %266 : vector<16x1xf32> to vector<16x8xf32>
    %268 = vector.broadcast %261 : vector<1x8xf32> to vector<16x8xf32>
    %269 = arith.addf %267, %268 : vector<16x8xf32>
    %cst_101 = arith.constant 0.000000e+00 : f32
    %270 = vector.broadcast %cst_101 : f32 to vector<16x8xf32>
    %271 = arith.cmpf oge, %269, %270 : vector<16x8xf32>
    %cst_102 = arith.constant 0.00999999977 : f32
    %272 = vector.broadcast %cst_102 : f32 to vector<16x8xf32>
    %273 = arith.mulf %272, %269 : vector<16x8xf32>
    %274 = arith.select %271, %269, %273 : vector<16x8xi1>, vector<16x8xf32>
    %cst_103 = arith.constant 0.000000e+00 : f32
    %275 = vector.broadcast %cst_103 : f32 to vector<16x8xf32>
    %276 = arith.cmpf ogt, %125, %275 : vector<16x8xf32>
    %cst_104 = arith.constant -1.000000e+30 : f32
    %277 = vector.broadcast %cst_104 : f32 to vector<16x8xf32>
    %278 = arith.select %276, %274, %277 : vector<16x8xi1>, vector<16x8xf32>
    %cst_105 = arith.constant dense<0xFF800000> : vector<16xf32>
    %279 = vector.multi_reduction <maximumf>, %278, %cst_105 [1] : vector<16x8xf32> to vector<16xf32>
    %280 = vector.shape_cast %279 : vector<16xf32> to vector<16x1xf32>
    %281 = vector.broadcast %280 : vector<16x1xf32> to vector<16x8xf32>
    %282 = arith.subf %278, %281 : vector<16x8xf32>
    %283 = math.exp %282 : vector<16x8xf32>
    %284 = arith.mulf %283, %125 : vector<16x8xf32>
    %cst_106 = arith.constant dense<0.000000e+00> : vector<16xf32>
    %285 = vector.multi_reduction <add>, %284, %cst_106 [1] : vector<16x8xf32> to vector<16xf32>
    %286 = vector.shape_cast %285 : vector<16xf32> to vector<16x1xf32>
    %cst_107 = arith.constant 0.000000e+00 : f32
    %287 = vector.broadcast %cst_107 : f32 to vector<16x1xf32>
    %288 = arith.cmpf oeq, %286, %287 : vector<16x1xf32>
    %cst_108 = arith.constant 1.000000e+00 : f32
    %289 = vector.broadcast %cst_108 : f32 to vector<16x1xf32>
    %290 = arith.select %288, %289, %286 : vector<16x1xi1>, vector<16x1xf32>
    %291 = vector.broadcast %290 : vector<16x1xf32> to vector<16x8xf32>
    %292 = arith.divf %284, %291 : vector<16x8xf32>
    %cst_109 = arith.constant dense<0.000000e+00> : vector<16x128xf32>
    %293 = tpu.matmul %292, %54, %cst_109 {dimension_numbers = #tpu.dot_dimension_numbers<[1], [0], [0], [1], [0, 0, 1, 1], [], []>} : vector<16x8xf32>, vector<8x128xf32>, vector<16x128xf32> -> vector<16x128xf32>
    %294 = vector.extract_strided_slice %3 {offsets = [2, 0], sizes = [1, 128], strides = [1, 1]} : vector<4x128xf32> to vector<1x128xf32>
    %295 = vector.broadcast %294 : vector<1x128xf32> to vector<16x128xf32>
    %296 = arith.addf %293, %295 : vector<16x128xf32>
    %cst_110 = arith.constant dense<0.000000e+00> : vector<128xf32>
    %297 = vector.multi_reduction <add>, %296, %cst_110 [0] : vector<16x128xf32> to vector<128xf32>
    %298 = vector.shape_cast %297 : vector<128xf32> to vector<1x128xf32>
    %cst_111 = arith.constant 1.600000e+01 : f32
    %299 = vector.broadcast %cst_111 : f32 to vector<1x128xf32>
    %300 = arith.divf %298, %299 : vector<1x128xf32>
    %301 = vector.broadcast %300 : vector<1x128xf32> to vector<16x128xf32>
    %302 = arith.subf %296, %301 : vector<16x128xf32>
    %303 = arith.mulf %302, %302 : vector<16x128xf32>
    %cst_112 = arith.constant dense<0.000000e+00> : vector<128xf32>
    %304 = vector.multi_reduction <add>, %303, %cst_112 [0] : vector<16x128xf32> to vector<128xf32>
    %305 = vector.shape_cast %304 : vector<128xf32> to vector<1x128xf32>
    %cst_113 = arith.constant 1.600000e+01 : f32
    %306 = vector.broadcast %cst_113 : f32 to vector<1x128xf32>
    %307 = arith.divf %305, %306 : vector<1x128xf32>
    %308 = vector.broadcast %300 : vector<1x128xf32> to vector<16x128xf32>
    %309 = arith.subf %296, %308 : vector<16x128xf32>
    %cst_114 = arith.constant 9.99999974E-6 : f32
    %310 = vector.broadcast %cst_114 : f32 to vector<1x128xf32>
    %311 = arith.addf %307, %310 : vector<1x128xf32>
    %312 = math.rsqrt %311 : vector<1x128xf32>
    %313 = vector.broadcast %312 : vector<1x128xf32> to vector<16x128xf32>
    %314 = arith.mulf %309, %313 : vector<16x128xf32>
    %315 = vector.extract_strided_slice %4 {offsets = [2, 0], sizes = [1, 128], strides = [1, 1]} : vector<4x128xf32> to vector<1x128xf32>
    %316 = vector.broadcast %315 : vector<1x128xf32> to vector<16x128xf32>
    %317 = arith.mulf %314, %316 : vector<16x128xf32>
    %318 = vector.extract_strided_slice %5 {offsets = [2, 0], sizes = [1, 128], strides = [1, 1]} : vector<4x128xf32> to vector<1x128xf32>
    %319 = vector.broadcast %318 : vector<1x128xf32> to vector<16x128xf32>
    %320 = arith.addf %317, %319 : vector<16x128xf32>
    %c2_115 = arith.constant 2 : index
    %321 = memref.load %arg15[%c2_115] : memref<4xf32, #tpu.memory_space<smem>>
    %cst_116 = arith.constant 0.000000e+00 : f32
    %322 = vector.broadcast %cst_116 : f32 to vector<16x128xf32>
    %323 = arith.cmpf oge, %320, %322 : vector<16x128xf32>
    %324 = vector.broadcast %321 : f32 to vector<16x128xf32>
    %325 = arith.mulf %324, %320 : vector<16x128xf32>
    %326 = arith.select %323, %320, %325 : vector<16x128xi1>, vector<16x128xf32>
    %327 = vector.extract_strided_slice %6 {offsets = [0, 0], sizes = [16, 1], strides = [1, 1]} : vector<16x3xf32> to vector<16x1xf32>
    %cst_117 = arith.constant 1.000000e+00 : f32
    %328 = vector.broadcast %cst_117 : f32 to vector<16x1xf32>
    %329 = arith.subf %328, %327 : vector<16x1xf32>
    %330 = arith.addf %192, %326 : vector<16x128xf32>
    %331 = arith.mulf %199, %329 : vector<16x1xf32>
    %332 = vector.broadcast %331 : vector<16x1xf32> to vector<16x8xf32>
    %333 = vector.broadcast %194 : vector<1x8xf32> to vector<16x8xf32>
    %334 = arith.addf %332, %333 : vector<16x8xf32>
    %cst_118 = arith.constant 0.000000e+00 : f32
    %335 = vector.broadcast %cst_118 : f32 to vector<16x8xf32>
    %336 = arith.cmpf oge, %334, %335 : vector<16x8xf32>
    %cst_119 = arith.constant 0.00999999977 : f32
    %337 = vector.broadcast %cst_119 : f32 to vector<16x8xf32>
    %338 = arith.mulf %337, %334 : vector<16x8xf32>
    %339 = arith.select %336, %334, %338 : vector<16x8xi1>, vector<16x8xf32>
    %cst_120 = arith.constant 0.000000e+00 : f32
    %340 = vector.broadcast %cst_120 : f32 to vector<16x8xf32>
    %341 = arith.cmpf ogt, %124, %340 : vector<16x8xf32>
    %cst_121 = arith.constant -1.000000e+30 : f32
    %342 = vector.broadcast %cst_121 : f32 to vector<16x8xf32>
    %343 = arith.select %341, %339, %342 : vector<16x8xi1>, vector<16x8xf32>
    %cst_122 = arith.constant dense<0xFF800000> : vector<16xf32>
    %344 = vector.multi_reduction <maximumf>, %343, %cst_122 [1] : vector<16x8xf32> to vector<16xf32>
    %345 = vector.shape_cast %344 : vector<16xf32> to vector<16x1xf32>
    %346 = vector.broadcast %345 : vector<16x1xf32> to vector<16x8xf32>
    %347 = arith.subf %343, %346 : vector<16x8xf32>
    %348 = math.exp %347 : vector<16x8xf32>
    %349 = arith.mulf %348, %124 : vector<16x8xf32>
    %cst_123 = arith.constant dense<0.000000e+00> : vector<16xf32>
    %350 = vector.multi_reduction <add>, %349, %cst_123 [1] : vector<16x8xf32> to vector<16xf32>
    %351 = vector.shape_cast %350 : vector<16xf32> to vector<16x1xf32>
    %cst_124 = arith.constant 0.000000e+00 : f32
    %352 = vector.broadcast %cst_124 : f32 to vector<16x1xf32>
    %353 = arith.cmpf oeq, %351, %352 : vector<16x1xf32>
    %cst_125 = arith.constant 1.000000e+00 : f32
    %354 = vector.broadcast %cst_125 : f32 to vector<16x1xf32>
    %355 = arith.select %353, %354, %351 : vector<16x1xi1>, vector<16x1xf32>
    %356 = vector.broadcast %355 : vector<16x1xf32> to vector<16x8xf32>
    %357 = arith.divf %349, %356 : vector<16x8xf32>
    %cst_126 = arith.constant dense<0.000000e+00> : vector<16x128xf32>
    %358 = tpu.matmul %357, %42, %cst_126 {dimension_numbers = #tpu.dot_dimension_numbers<[1], [0], [0], [1], [0, 0, 1, 1], [], []>} : vector<16x8xf32>, vector<8x128xf32>, vector<16x128xf32> -> vector<16x128xf32>
    %359 = vector.extract_strided_slice %3 {offsets = [1, 0], sizes = [1, 128], strides = [1, 1]} : vector<4x128xf32> to vector<1x128xf32>
    %360 = vector.broadcast %359 : vector<1x128xf32> to vector<16x128xf32>
    %361 = arith.addf %358, %360 : vector<16x128xf32>
    %cst_127 = arith.constant dense<0.000000e+00> : vector<128xf32>
    %362 = vector.multi_reduction <add>, %361, %cst_127 [0] : vector<16x128xf32> to vector<128xf32>
    %363 = vector.shape_cast %362 : vector<128xf32> to vector<1x128xf32>
    %cst_128 = arith.constant 1.600000e+01 : f32
    %364 = vector.broadcast %cst_128 : f32 to vector<1x128xf32>
    %365 = arith.divf %363, %364 : vector<1x128xf32>
    %366 = vector.broadcast %365 : vector<1x128xf32> to vector<16x128xf32>
    %367 = arith.subf %361, %366 : vector<16x128xf32>
    %368 = arith.mulf %367, %367 : vector<16x128xf32>
    %cst_129 = arith.constant dense<0.000000e+00> : vector<128xf32>
    %369 = vector.multi_reduction <add>, %368, %cst_129 [0] : vector<16x128xf32> to vector<128xf32>
    %370 = vector.shape_cast %369 : vector<128xf32> to vector<1x128xf32>
    %cst_130 = arith.constant 1.600000e+01 : f32
    %371 = vector.broadcast %cst_130 : f32 to vector<1x128xf32>
    %372 = arith.divf %370, %371 : vector<1x128xf32>
    %373 = vector.broadcast %365 : vector<1x128xf32> to vector<16x128xf32>
    %374 = arith.subf %361, %373 : vector<16x128xf32>
    %cst_131 = arith.constant 9.99999974E-6 : f32
    %375 = vector.broadcast %cst_131 : f32 to vector<1x128xf32>
    %376 = arith.addf %372, %375 : vector<1x128xf32>
    %377 = math.rsqrt %376 : vector<1x128xf32>
    %378 = vector.broadcast %377 : vector<1x128xf32> to vector<16x128xf32>
    %379 = arith.mulf %374, %378 : vector<16x128xf32>
    %380 = vector.extract_strided_slice %4 {offsets = [1, 0], sizes = [1, 128], strides = [1, 1]} : vector<4x128xf32> to vector<1x128xf32>
    %381 = vector.broadcast %380 : vector<1x128xf32> to vector<16x128xf32>
    %382 = arith.mulf %379, %381 : vector<16x128xf32>
    %383 = vector.extract_strided_slice %5 {offsets = [1, 0], sizes = [1, 128], strides = [1, 1]} : vector<4x128xf32> to vector<1x128xf32>
    %384 = vector.broadcast %383 : vector<1x128xf32> to vector<16x128xf32>
    %385 = arith.addf %382, %384 : vector<16x128xf32>
    %c1_132 = arith.constant 1 : index
    %386 = memref.load %arg15[%c1_132] : memref<4xf32, #tpu.memory_space<smem>>
    %cst_133 = arith.constant 0.000000e+00 : f32
    %387 = vector.broadcast %cst_133 : f32 to vector<16x128xf32>
    %388 = arith.cmpf oge, %385, %387 : vector<16x128xf32>
    %389 = vector.broadcast %386 : f32 to vector<16x128xf32>
    %390 = arith.mulf %389, %385 : vector<16x128xf32>
    %391 = arith.select %388, %385, %390 : vector<16x128xi1>, vector<16x128xf32>
    %392 = arith.mulf %391, %391 : vector<16x128xf32>
    %cst_134 = arith.constant dense<0.000000e+00> : vector<16xf32>
    %393 = vector.multi_reduction <add>, %392, %cst_134 [1] : vector<16x128xf32> to vector<16xf32>
    %394 = vector.shape_cast %393 : vector<16xf32> to vector<16x1xf32>
    %cst_135 = arith.constant 1.000000e-24 : f32
    %395 = vector.broadcast %cst_135 : f32 to vector<16x1xf32>
    %396 = arith.maximumf %394, %395 : vector<16x1xf32>
    %397 = math.rsqrt %396 : vector<16x1xf32>
    %398 = vector.broadcast %397 : vector<16x1xf32> to vector<16x128xf32>
    %399 = arith.mulf %391, %398 : vector<16x128xf32>
    %400 = arith.mulf %330, %330 : vector<16x128xf32>
    %cst_136 = arith.constant dense<0.000000e+00> : vector<16xf32>
    %401 = vector.multi_reduction <add>, %400, %cst_136 [1] : vector<16x128xf32> to vector<16xf32>
    %402 = vector.shape_cast %401 : vector<16xf32> to vector<16x1xf32>
    %cst_137 = arith.constant 1.000000e-24 : f32
    %403 = vector.broadcast %cst_137 : f32 to vector<16x1xf32>
    %404 = arith.maximumf %402, %403 : vector<16x1xf32>
    %405 = math.rsqrt %404 : vector<16x1xf32>
    %406 = vector.broadcast %405 : vector<16x1xf32> to vector<16x128xf32>
    %407 = arith.mulf %330, %406 : vector<16x128xf32>
    %408 = arith.mulf %399, %407 : vector<16x128xf32>
    %cst_138 = arith.constant dense<0.000000e+00> : vector<16xf32>
    %409 = vector.multi_reduction <add>, %408, %cst_138 [1] : vector<16x128xf32> to vector<16xf32>
    %410 = vector.shape_cast %409 : vector<16xf32> to vector<16x1xf32>
    %cst_139 = arith.constant 1.000000e+00 : f32
    %411 = vector.broadcast %cst_139 : f32 to vector<16x1xf32>
    %412 = arith.subf %411, %410 : vector<16x1xf32>
    %413 = arith.mulf %412, %327 : vector<16x1xf32>
    %414 = vector.shape_cast %413 : vector<16x1xf32> to vector<1x16x1xf32>
    %cst_140 = arith.constant dense<0.000000e+00> : vector<1xf32>
    %415 = vector.multi_reduction <add>, %414, %cst_140 [1, 2] : vector<1x16x1xf32> to vector<1xf32>
    %416 = vector.shape_cast %415 : vector<1xf32> to vector<1x1x1xf32>
    %417 = vector.extract %416[0, 0, 0] : f32 from vector<1x1x1xf32>
    %cst_141 = arith.constant 1.250000e-01 : f32
    %418 = arith.mulf %417, %cst_141 : f32
    %cst_142 = arith.constant 0.000000e+00 : f32
    %419 = arith.addf %cst_142, %418 : f32
    %420 = vector.extract_strided_slice %6 {offsets = [0, 1], sizes = [16, 1], strides = [1, 1]} : vector<16x3xf32> to vector<16x1xf32>
    %cst_143 = arith.constant 1.000000e+00 : f32
    %421 = vector.broadcast %cst_143 : f32 to vector<16x1xf32>
    %422 = arith.subf %421, %420 : vector<16x1xf32>
    %423 = arith.addf %192, %259 : vector<16x128xf32>
    %424 = arith.mulf %266, %422 : vector<16x1xf32>
    %425 = vector.broadcast %424 : vector<16x1xf32> to vector<16x8xf32>
    %426 = vector.broadcast %261 : vector<1x8xf32> to vector<16x8xf32>
    %427 = arith.addf %425, %426 : vector<16x8xf32>
    %cst_144 = arith.constant 0.000000e+00 : f32
    %428 = vector.broadcast %cst_144 : f32 to vector<16x8xf32>
    %429 = arith.cmpf oge, %427, %428 : vector<16x8xf32>
    %cst_145 = arith.constant 0.00999999977 : f32
    %430 = vector.broadcast %cst_145 : f32 to vector<16x8xf32>
    %431 = arith.mulf %430, %427 : vector<16x8xf32>
    %432 = arith.select %429, %427, %431 : vector<16x8xi1>, vector<16x8xf32>
    %cst_146 = arith.constant 0.000000e+00 : f32
    %433 = vector.broadcast %cst_146 : f32 to vector<16x8xf32>
    %434 = arith.cmpf ogt, %125, %433 : vector<16x8xf32>
    %cst_147 = arith.constant -1.000000e+30 : f32
    %435 = vector.broadcast %cst_147 : f32 to vector<16x8xf32>
    %436 = arith.select %434, %432, %435 : vector<16x8xi1>, vector<16x8xf32>
    %cst_148 = arith.constant dense<0xFF800000> : vector<16xf32>
    %437 = vector.multi_reduction <maximumf>, %436, %cst_148 [1] : vector<16x8xf32> to vector<16xf32>
    %438 = vector.shape_cast %437 : vector<16xf32> to vector<16x1xf32>
    %439 = vector.broadcast %438 : vector<16x1xf32> to vector<16x8xf32>
    %440 = arith.subf %436, %439 : vector<16x8xf32>
    %441 = math.exp %440 : vector<16x8xf32>
    %442 = arith.mulf %441, %125 : vector<16x8xf32>
    %cst_149 = arith.constant dense<0.000000e+00> : vector<16xf32>
    %443 = vector.multi_reduction <add>, %442, %cst_149 [1] : vector<16x8xf32> to vector<16xf32>
    %444 = vector.shape_cast %443 : vector<16xf32> to vector<16x1xf32>
    %cst_150 = arith.constant 0.000000e+00 : f32
    %445 = vector.broadcast %cst_150 : f32 to vector<16x1xf32>
    %446 = arith.cmpf oeq, %444, %445 : vector<16x1xf32>
    %cst_151 = arith.constant 1.000000e+00 : f32
    %447 = vector.broadcast %cst_151 : f32 to vector<16x1xf32>
    %448 = arith.select %446, %447, %444 : vector<16x1xi1>, vector<16x1xf32>
    %449 = vector.broadcast %448 : vector<16x1xf32> to vector<16x8xf32>
    %450 = arith.divf %442, %449 : vector<16x8xf32>
    %cst_152 = arith.constant dense<0.000000e+00> : vector<16x128xf32>
    %451 = tpu.matmul %450, %54, %cst_152 {dimension_numbers = #tpu.dot_dimension_numbers<[1], [0], [0], [1], [0, 0, 1, 1], [], []>} : vector<16x8xf32>, vector<8x128xf32>, vector<16x128xf32> -> vector<16x128xf32>
    %452 = vector.extract_strided_slice %3 {offsets = [2, 0], sizes = [1, 128], strides = [1, 1]} : vector<4x128xf32> to vector<1x128xf32>
    %453 = vector.broadcast %452 : vector<1x128xf32> to vector<16x128xf32>
    %454 = arith.addf %451, %453 : vector<16x128xf32>
    %cst_153 = arith.constant dense<0.000000e+00> : vector<128xf32>
    %455 = vector.multi_reduction <add>, %454, %cst_153 [0] : vector<16x128xf32> to vector<128xf32>
    %456 = vector.shape_cast %455 : vector<128xf32> to vector<1x128xf32>
    %cst_154 = arith.constant 1.600000e+01 : f32
    %457 = vector.broadcast %cst_154 : f32 to vector<1x128xf32>
    %458 = arith.divf %456, %457 : vector<1x128xf32>
    %459 = vector.broadcast %458 : vector<1x128xf32> to vector<16x128xf32>
    %460 = arith.subf %454, %459 : vector<16x128xf32>
    %461 = arith.mulf %460, %460 : vector<16x128xf32>
    %cst_155 = arith.constant dense<0.000000e+00> : vector<128xf32>
    %462 = vector.multi_reduction <add>, %461, %cst_155 [0] : vector<16x128xf32> to vector<128xf32>
    %463 = vector.shape_cast %462 : vector<128xf32> to vector<1x128xf32>
    %cst_156 = arith.constant 1.600000e+01 : f32
    %464 = vector.broadcast %cst_156 : f32 to vector<1x128xf32>
    %465 = arith.divf %463, %464 : vector<1x128xf32>
    %466 = vector.broadcast %458 : vector<1x128xf32> to vector<16x128xf32>
    %467 = arith.subf %454, %466 : vector<16x128xf32>
    %cst_157 = arith.constant 9.99999974E-6 : f32
    %468 = vector.broadcast %cst_157 : f32 to vector<1x128xf32>
    %469 = arith.addf %465, %468 : vector<1x128xf32>
    %470 = math.rsqrt %469 : vector<1x128xf32>
    %471 = vector.broadcast %470 : vector<1x128xf32> to vector<16x128xf32>
    %472 = arith.mulf %467, %471 : vector<16x128xf32>
    %473 = vector.extract_strided_slice %4 {offsets = [2, 0], sizes = [1, 128], strides = [1, 1]} : vector<4x128xf32> to vector<1x128xf32>
    %474 = vector.broadcast %473 : vector<1x128xf32> to vector<16x128xf32>
    %475 = arith.mulf %472, %474 : vector<16x128xf32>
    %476 = vector.extract_strided_slice %5 {offsets = [2, 0], sizes = [1, 128], strides = [1, 1]} : vector<4x128xf32> to vector<1x128xf32>
    %477 = vector.broadcast %476 : vector<1x128xf32> to vector<16x128xf32>
    %478 = arith.addf %475, %477 : vector<16x128xf32>
    %c2_158 = arith.constant 2 : index
    %479 = memref.load %arg15[%c2_158] : memref<4xf32, #tpu.memory_space<smem>>
    %cst_159 = arith.constant 0.000000e+00 : f32
    %480 = vector.broadcast %cst_159 : f32 to vector<16x128xf32>
    %481 = arith.cmpf oge, %478, %480 : vector<16x128xf32>
    %482 = vector.broadcast %479 : f32 to vector<16x128xf32>
    %483 = arith.mulf %482, %478 : vector<16x128xf32>
    %484 = arith.select %481, %478, %483 : vector<16x128xi1>, vector<16x128xf32>
    %485 = arith.mulf %484, %484 : vector<16x128xf32>
    %cst_160 = arith.constant dense<0.000000e+00> : vector<16xf32>
    %486 = vector.multi_reduction <add>, %485, %cst_160 [1] : vector<16x128xf32> to vector<16xf32>
    %487 = vector.shape_cast %486 : vector<16xf32> to vector<16x1xf32>
    %cst_161 = arith.constant 1.000000e-24 : f32
    %488 = vector.broadcast %cst_161 : f32 to vector<16x1xf32>
    %489 = arith.maximumf %487, %488 : vector<16x1xf32>
    %490 = math.rsqrt %489 : vector<16x1xf32>
    %491 = vector.broadcast %490 : vector<16x1xf32> to vector<16x128xf32>
    %492 = arith.mulf %484, %491 : vector<16x128xf32>
    %493 = arith.mulf %423, %423 : vector<16x128xf32>
    %cst_162 = arith.constant dense<0.000000e+00> : vector<16xf32>
    %494 = vector.multi_reduction <add>, %493, %cst_162 [1] : vector<16x128xf32> to vector<16xf32>
    %495 = vector.shape_cast %494 : vector<16xf32> to vector<16x1xf32>
    %cst_163 = arith.constant 1.000000e-24 : f32
    %496 = vector.broadcast %cst_163 : f32 to vector<16x1xf32>
    %497 = arith.maximumf %495, %496 : vector<16x1xf32>
    %498 = math.rsqrt %497 : vector<16x1xf32>
    %499 = vector.broadcast %498 : vector<16x1xf32> to vector<16x128xf32>
    %500 = arith.mulf %423, %499 : vector<16x128xf32>
    %501 = arith.mulf %492, %500 : vector<16x128xf32>
    %cst_164 = arith.constant dense<0.000000e+00> : vector<16xf32>
    %502 = vector.multi_reduction <add>, %501, %cst_164 [1] : vector<16x128xf32> to vector<16xf32>
    %503 = vector.shape_cast %502 : vector<16xf32> to vector<16x1xf32>
    %cst_165 = arith.constant 1.000000e+00 : f32
    %504 = vector.broadcast %cst_165 : f32 to vector<16x1xf32>
    %505 = arith.subf %504, %503 : vector<16x1xf32>
    %506 = arith.mulf %505, %420 : vector<16x1xf32>
    %507 = vector.shape_cast %506 : vector<16x1xf32> to vector<1x16x1xf32>
    %cst_166 = arith.constant dense<0.000000e+00> : vector<1xf32>
    %508 = vector.multi_reduction <add>, %507, %cst_166 [1, 2] : vector<1x16x1xf32> to vector<1xf32>
    %509 = vector.shape_cast %508 : vector<1xf32> to vector<1x1x1xf32>
    %510 = vector.extract %509[0, 0, 0] : f32 from vector<1x1x1xf32>
    %cst_167 = arith.constant 1.250000e-01 : f32
    %511 = arith.mulf %510, %cst_167 : f32
    %512 = arith.addf %419, %511 : f32
    %513 = vector.extract_strided_slice %6 {offsets = [0, 2], sizes = [16, 1], strides = [1, 1]} : vector<16x3xf32> to vector<16x1xf32>
    %cst_168 = arith.constant 1.000000e+00 : f32
    %514 = vector.broadcast %cst_168 : f32 to vector<16x1xf32>
    %515 = arith.subf %514, %513 : vector<16x1xf32>
    %516 = arith.addf %259, %326 : vector<16x128xf32>
    %517 = arith.mulf %132, %515 : vector<16x1xf32>
    %518 = vector.broadcast %517 : vector<16x1xf32> to vector<16x16xf32>
    %519 = vector.broadcast %127 : vector<1x16xf32> to vector<16x16xf32>
    %520 = arith.addf %518, %519 : vector<16x16xf32>
    %cst_169 = arith.constant 0.000000e+00 : f32
    %521 = vector.broadcast %cst_169 : f32 to vector<16x16xf32>
    %522 = arith.cmpf oge, %520, %521 : vector<16x16xf32>
    %cst_170 = arith.constant 0.00999999977 : f32
    %523 = vector.broadcast %cst_170 : f32 to vector<16x16xf32>
    %524 = arith.mulf %523, %520 : vector<16x16xf32>
    %525 = arith.select %522, %520, %524 : vector<16x16xi1>, vector<16x16xf32>
    %cst_171 = arith.constant 0.000000e+00 : f32
    %526 = vector.broadcast %cst_171 : f32 to vector<16x16xf32>
    %527 = arith.cmpf ogt, %123, %526 : vector<16x16xf32>
    %cst_172 = arith.constant -1.000000e+30 : f32
    %528 = vector.broadcast %cst_172 : f32 to vector<16x16xf32>
    %529 = arith.select %527, %525, %528 : vector<16x16xi1>, vector<16x16xf32>
    %cst_173 = arith.constant dense<0xFF800000> : vector<16xf32>
    %530 = vector.multi_reduction <maximumf>, %529, %cst_173 [1] : vector<16x16xf32> to vector<16xf32>
    %531 = vector.shape_cast %530 : vector<16xf32> to vector<16x1xf32>
    %532 = vector.broadcast %531 : vector<16x1xf32> to vector<16x16xf32>
    %533 = arith.subf %529, %532 : vector<16x16xf32>
    %534 = math.exp %533 : vector<16x16xf32>
    %535 = arith.mulf %534, %123 : vector<16x16xf32>
    %cst_174 = arith.constant dense<0.000000e+00> : vector<16xf32>
    %536 = vector.multi_reduction <add>, %535, %cst_174 [1] : vector<16x16xf32> to vector<16xf32>
    %537 = vector.shape_cast %536 : vector<16xf32> to vector<16x1xf32>
    %cst_175 = arith.constant 0.000000e+00 : f32
    %538 = vector.broadcast %cst_175 : f32 to vector<16x1xf32>
    %539 = arith.cmpf oeq, %537, %538 : vector<16x1xf32>
    %cst_176 = arith.constant 1.000000e+00 : f32
    %540 = vector.broadcast %cst_176 : f32 to vector<16x1xf32>
    %541 = arith.select %539, %540, %537 : vector<16x1xi1>, vector<16x1xf32>
    %542 = vector.broadcast %541 : vector<16x1xf32> to vector<16x16xf32>
    %543 = arith.divf %535, %542 : vector<16x16xf32>
    %cst_177 = arith.constant dense<0.000000e+00> : vector<16x128xf32>
    %544 = tpu.matmul %543, %122, %cst_177 {dimension_numbers = #tpu.dot_dimension_numbers<[1], [0], [0], [1], [0, 0, 1, 1], [], []>} : vector<16x16xf32>, vector<16x128xf32>, vector<16x128xf32> -> vector<16x128xf32>
    %545 = vector.extract_strided_slice %3 {offsets = [0, 0], sizes = [1, 128], strides = [1, 1]} : vector<4x128xf32> to vector<1x128xf32>
    %546 = vector.broadcast %545 : vector<1x128xf32> to vector<16x128xf32>
    %547 = arith.addf %544, %546 : vector<16x128xf32>
    %cst_178 = arith.constant dense<0.000000e+00> : vector<128xf32>
    %548 = vector.multi_reduction <add>, %547, %cst_178 [0] : vector<16x128xf32> to vector<128xf32>
    %549 = vector.shape_cast %548 : vector<128xf32> to vector<1x128xf32>
    %cst_179 = arith.constant 1.600000e+01 : f32
    %550 = vector.broadcast %cst_179 : f32 to vector<1x128xf32>
    %551 = arith.divf %549, %550 : vector<1x128xf32>
    %552 = vector.broadcast %551 : vector<1x128xf32> to vector<16x128xf32>
    %553 = arith.subf %547, %552 : vector<16x128xf32>
    %554 = arith.mulf %553, %553 : vector<16x128xf32>
    %cst_180 = arith.constant dense<0.000000e+00> : vector<128xf32>
    %555 = vector.multi_reduction <add>, %554, %cst_180 [0] : vector<16x128xf32> to vector<128xf32>
    %556 = vector.shape_cast %555 : vector<128xf32> to vector<1x128xf32>
    %cst_181 = arith.constant 1.600000e+01 : f32
    %557 = vector.broadcast %cst_181 : f32 to vector<1x128xf32>
    %558 = arith.divf %556, %557 : vector<1x128xf32>
    %559 = vector.broadcast %551 : vector<1x128xf32> to vector<16x128xf32>
    %560 = arith.subf %547, %559 : vector<16x128xf32>
    %cst_182 = arith.constant 9.99999974E-6 : f32
    %561 = vector.broadcast %cst_182 : f32 to vector<1x128xf32>
    %562 = arith.addf %558, %561 : vector<1x128xf32>
    %563 = math.rsqrt %562 : vector<1x128xf32>
    %564 = vector.broadcast %563 : vector<1x128xf32> to vector<16x128xf32>
    %565 = arith.mulf %560, %564 : vector<16x128xf32>
    %566 = vector.extract_strided_slice %4 {offsets = [0, 0], sizes = [1, 128], strides = [1, 1]} : vector<4x128xf32> to vector<1x128xf32>
    %567 = vector.broadcast %566 : vector<1x128xf32> to vector<16x128xf32>
    %568 = arith.mulf %565, %567 : vector<16x128xf32>
    %569 = vector.extract_strided_slice %5 {offsets = [0, 0], sizes = [1, 128], strides = [1, 1]} : vector<4x128xf32> to vector<1x128xf32>
    %570 = vector.broadcast %569 : vector<1x128xf32> to vector<16x128xf32>
    %571 = arith.addf %568, %570 : vector<16x128xf32>
    %c0_183 = arith.constant 0 : index
    %572 = memref.load %arg15[%c0_183] : memref<4xf32, #tpu.memory_space<smem>>
    %cst_184 = arith.constant 0.000000e+00 : f32
    %573 = vector.broadcast %cst_184 : f32 to vector<16x128xf32>
    %574 = arith.cmpf oge, %571, %573 : vector<16x128xf32>
    %575 = vector.broadcast %572 : f32 to vector<16x128xf32>
    %576 = arith.mulf %575, %571 : vector<16x128xf32>
    %577 = arith.select %574, %571, %576 : vector<16x128xi1>, vector<16x128xf32>
    %578 = arith.mulf %577, %577 : vector<16x128xf32>
    %cst_185 = arith.constant dense<0.000000e+00> : vector<16xf32>
    %579 = vector.multi_reduction <add>, %578, %cst_185 [1] : vector<16x128xf32> to vector<16xf32>
    %580 = vector.shape_cast %579 : vector<16xf32> to vector<16x1xf32>
    %cst_186 = arith.constant 1.000000e-24 : f32
    %581 = vector.broadcast %cst_186 : f32 to vector<16x1xf32>
    %582 = arith.maximumf %580, %581 : vector<16x1xf32>
    %583 = math.rsqrt %582 : vector<16x1xf32>
    %584 = vector.broadcast %583 : vector<16x1xf32> to vector<16x128xf32>
    %585 = arith.mulf %577, %584 : vector<16x128xf32>
    %586 = arith.mulf %516, %516 : vector<16x128xf32>
    %cst_187 = arith.constant dense<0.000000e+00> : vector<16xf32>
    %587 = vector.multi_reduction <add>, %586, %cst_187 [1] : vector<16x128xf32> to vector<16xf32>
    %588 = vector.shape_cast %587 : vector<16xf32> to vector<16x1xf32>
    %cst_188 = arith.constant 1.000000e-24 : f32
    %589 = vector.broadcast %cst_188 : f32 to vector<16x1xf32>
    %590 = arith.maximumf %588, %589 : vector<16x1xf32>
    %591 = math.rsqrt %590 : vector<16x1xf32>
    %592 = vector.broadcast %591 : vector<16x1xf32> to vector<16x128xf32>
    %593 = arith.mulf %516, %592 : vector<16x128xf32>
    %594 = arith.mulf %585, %593 : vector<16x128xf32>
    %cst_189 = arith.constant dense<0.000000e+00> : vector<16xf32>
    %595 = vector.multi_reduction <add>, %594, %cst_189 [1] : vector<16x128xf32> to vector<16xf32>
    %596 = vector.shape_cast %595 : vector<16xf32> to vector<16x1xf32>
    %cst_190 = arith.constant 1.000000e+00 : f32
    %597 = vector.broadcast %cst_190 : f32 to vector<16x1xf32>
    %598 = arith.subf %597, %596 : vector<16x1xf32>
    %599 = arith.mulf %598, %513 : vector<16x1xf32>
    %600 = vector.shape_cast %599 : vector<16x1xf32> to vector<1x16x1xf32>
    %cst_191 = arith.constant dense<0.000000e+00> : vector<1xf32>
    %601 = vector.multi_reduction <add>, %600, %cst_191 [1, 2] : vector<1x16x1xf32> to vector<1xf32>
    %602 = vector.shape_cast %601 : vector<1xf32> to vector<1x1x1xf32>
    %603 = vector.extract %602[0, 0, 0] : f32 from vector<1x1x1xf32>
    %cst_192 = arith.constant 1.250000e-01 : f32
    %604 = arith.mulf %603, %cst_192 : f32
    %605 = arith.addf %512, %604 : f32
    %c0_193 = arith.constant 0 : index
    %c0_194 = arith.constant 0 : index
    %606 = memref.load %arg21[%c0_193, %c0_194] : memref<1x1xf32, #tpu.memory_space<smem>>
    memref.store %605, %arg21[%c0_193, %c0_194] : memref<1x1xf32, #tpu.memory_space<smem>>
    return
  }
}

</mosaic_0001>

<llo_original>
// kernel: tpu_custom_call.1
$region0: #{tpu_custom_call.1}
  #allocation0 [shape = 'u32[]', space=smem, size = 0x4, offset = 0x4, fixed_abs, tag = 'smem constant byte address 0x4 - core index']
  #allocation1 [shape = 'u32[72,128]{1,0:T(1,128)}', space=vmem, size = 0x9000, scoped, tag = 'internal scratch']
  %s0 = inlined_call_operand.hbm [shape: f32[16,24], index: 0, kind: input, shape index: {}]
  %s1 = inlined_call_operand.hbm [shape: f32[16,16], index: 1, kind: input, shape index: {}]
  %s2 = inlined_call_operand.hbm [shape: f32[8,12], index: 2, kind: input, shape index: {}]
  %s3 = inlined_call_operand.hbm [shape: f32[8,20], index: 3, kind: input, shape index: {}]
  %s4 = inlined_call_operand.vmem [shape: f32[24,128], index: 4, kind: input, shape index: {}]
  %s5 = inlined_call_operand.hbm [shape: f32[16,128], index: 5, kind: input, shape index: {}]
  %s6 = inlined_call_operand.hbm [shape: f32[12,128], index: 6, kind: input, shape index: {}]
  %s7 = inlined_call_operand.vmem [shape: f32[20,128], index: 7, kind: input, shape index: {}]
  %s8 = inlined_call_operand.hbm [shape: f32[4,128], index: 8, kind: input, shape index: {}]
  %s9 = inlined_call_operand.hbm [shape: f32[4], index: 9, kind: input, shape index: {}]
  %s10 = inlined_call_operand.hbm [shape: f32[4,128], index: 10, kind: input, shape index: {}]
  %s11 = inlined_call_operand.hbm [shape: f32[4,128], index: 11, kind: input, shape index: {}]
  %s12 = inlined_call_operand.hbm [shape: f32[4,128], index: 12, kind: input, shape index: {}]
  %s13 = inlined_call_operand.hbm [shape: f32[4,128], index: 13, kind: input, shape index: {}]
  %s14 = inlined_call_operand.hbm [shape: f32[4,128], index: 14, kind: input, shape index: {}]
  %s15 = inlined_call_operand.hbm [shape: f32[4], index: 15, kind: input, shape index: {}]
  %s16 = inlined_call_operand.vmem [shape: f32[16,16], index: 16, kind: input, shape index: {}]
  %s17 = inlined_call_operand.vmem [shape: f32[16,8], index: 17, kind: input, shape index: {}]
  %s18 = inlined_call_operand.vmem [shape: f32[16,8], index: 18, kind: input, shape index: {}]
  %s19 = inlined_call_operand.hbm [shape: f32[16,16], index: 19, kind: input, shape index: {}]
  %s20 = inlined_call_operand.vmem [shape: f32[16,3], index: 20, kind: input, shape index: {}]
  %s21 = inlined_call_operand.hbm [shape: f32[1,1], index: 21, kind: output, shape index: {}]
  %s22 = sld [smem:[#allocation0]]
  $region154: #{tpu_custom_call.1} parent=0
    _
  %s24 = ssub.s32 1, %s22
  %s25 = scalar_select 0, %s24, %s22
  $region1: #{tpu_custom_call.1} parent=0
    #allocation2 [shape = 'u8[8192]{0}', space=vmem, size = 0x2000, scoped, tag = 'input window, operand 0, single buffered']
    #allocation3 [shape = 's32[1]{0}', space=sflag, size = 0x4, scoped, tag = 'scoped memory for tpu_custom_call.1']
    #allocation4 [shape = 's32[1]{0}', space=sflag, size = 0x4, scoped, tag = 'scoped memory for tpu_custom_call.1']
    #allocation5 [shape = 's32[1]{0}', space=sflag, size = 0x4, scoped, tag = 'scoped memory for tpu_custom_call.1']
    #allocation6 [shape = 'u8[8192]{0}', space=vmem, size = 0x2000, scoped, tag = 'input window, operand 1, single buffered']
    #allocation7 [shape = 's32[1]{0}', space=sflag, size = 0x4, scoped, tag = 'scoped memory for tpu_custom_call.1']
    #allocation8 [shape = 'u8[4096]{0}', space=vmem, size = 0x1000, scoped, tag = 'input window, operand 2, single buffered']
    #allocation9 [shape = 'u8[4096]{0}', space=vmem, size = 0x1000, scoped, tag = 'input window, operand 3, single buffered']
    #allocation10 [shape = 's32[1]{0}', space=sflag, size = 0x4, scoped, tag = 'scoped memory for tpu_custom_call.1']
    #allocation11 [shape = 'u8[8192]{0}', space=vmem, size = 0x2000, scoped, tag = 'input window, operand 5, single buffered']
    #allocation12 [shape = 'u8[8192]{0}', space=vmem, size = 0x2000, scoped, tag = 'input window, operand 6, single buffered']
    #allocation13 [shape = 's32[1]{0}', space=sflag, size = 0x4, scoped, tag = 'scoped memory for tpu_custom_call.1']
    #allocation14 [shape = 'u8[2048]{0}', space=vmem, size = 0x800, scoped, tag = 'input window, operand 8, single buffered']
    #allocation15 [shape = 'u8[512]{0}', space=smem, size = 0x200, scoped, tag = 'input window, operand 9, single buffered']
    #allocation16 [shape = 'u8[2048]{0}', space=vmem, size = 0x800, scoped, tag = 'input window, operand 10, single buffered']
    #allocation17 [shape = 's32[1]{0}', space=sflag, size = 0x4, scoped, tag = 'scoped memory for tpu_custom_call.1']
    #allocation18 [shape = 'u8[2048]{0}', space=vmem, size = 0x800, scoped, tag = 'input window, operand 11, single buffered']
    #allocation19 [shape = 'u8[2048]{0}', space=vmem, size = 0x800, scoped, tag = 'input window, operand 12, single buffered']
    #allocation20 [shape = 's32[1]{0}', space=sflag, size = 0x4, scoped, tag = 'scoped memory for tpu_custom_call.1']
    #allocation21 [shape = 'u8[2048]{0}', space=vmem, size = 0x800, scoped, tag = 'input window, operand 13, single buffered']
    #allocation22 [shape = 'u8[2048]{0}', space=vmem, size = 0x800, scoped, tag = 'input window, operand 14, single buffered']
    #allocation23 [shape = 's32[1]{0}', space=sflag, size = 0x4, scoped, tag = 'scoped memory for tpu_custom_call.1']
    #allocation24 [shape = 'u8[512]{0}', space=smem, size = 0x200, scoped, tag = 'input window, operand 15, single buffered']
    #allocation25 [shape = 's32[1]{0}', space=sflag, size = 0x4, scoped, tag = 'scoped memory for tpu_custom_call.1']
    #allocation26 [shape = 'u8[8192]{0}', space=vmem, size = 0x2000, scoped, tag = 'input window, operand 19, single buffered']
    #allocation27 [shape = 'u8[512]{0}', space=smem, size = 0x200, scoped, tag = 'output window, operand 0, single buffered']
    %26 = vsyncpa [#allocation3], 0
    %27 = vsyncpa [#allocation7], 0
    %28 = vsyncpa [#allocation10], 0
    %29 = vsyncpa [#allocation13], 0
    %30 = vsyncpa [#allocation4], 0
    %31 = vsyncpa [#allocation17], 0
    %32 = vsyncpa [#allocation20], 0
    %33 = vsyncpa [#allocation23], 0
    %34 = vsyncpa [#allocation25], 0
    %35 = vsyncpa [#allocation5], 0
    // Predicated region
    $region2: #{tpu_custom_call.1} parent=1 // pred_check
      _
    $region3: #{tpu_custom_call.1} parent=1 // pred_check_branch
      %37 = sbr.rel (0) target = $region5
    $region4: #{tpu_custom_call.1} parent=1 // pred_region
      %39 = vsyncadd [#allocation3], 0
      %s40 = sshll.u32 %s0, 4
      %s41 = int_to_ptr.hbm [resolvable:$true] %s40
      %s42 = sshll.u32 [#allocation2], 4
      %s43 = int_to_ptr.vmem [resolvable:$true] %s42
      %48 = dma.hbm_to_vmem [thread:$0]  %s41, 256, %s43, [#allocation3], 128, 128, 8
    $region5: #{tpu_custom_call.1} parent=1 // pred_fallthru
      _
    // Predicated region
    $region6: #{tpu_custom_call.1} parent=1 // pred_check
      _
    $region7: #{tpu_custom_call.1} parent=1 // pred_check_branch
      %50 = sbr.rel (0) target = $region9
    $region8: #{tpu_custom_call.1} parent=1 // pred_region
      %52 = vsyncadd [#allocation7], 0
      %s53 = sshll.u32 %s1, 4
      %s54 = int_to_ptr.hbm [resolvable:$true] %s53
      %s55 = sshll.u32 [#allocation6], 4
      %s56 = int_to_ptr.vmem [resolvable:$true] %s55
      %61 = dma.hbm_to_vmem [thread:$0]  %s54, 256, %s56, [#allocation7], 128, 128, 8
    $region9: #{tpu_custom_call.1} parent=1 // pred_fallthru
      _
    // Predicated region
    $region10: #{tpu_custom_call.1} parent=1 // pred_check
      _
    $region11: #{tpu_custom_call.1} parent=1 // pred_check_branch
      %63 = sbr.rel (0) target = $region13
    $region12: #{tpu_custom_call.1} parent=1 // pred_region
      %65 = vsyncadd [#allocation7], 0
      %s67 = sshll.u32 %s2, 4
      %s68 = int_to_ptr.hbm [resolvable:$true] %s67
      %s69 = sshll.u32 [#allocation8], 4
      %s70 = int_to_ptr.vmem [resolvable:$true] %s69
      %72 = dma.hbm_to_vmem [thread:$0]  %s68, 128, %s70, [#allocation7]
    $region13: #{tpu_custom_call.1} parent=1 // pred_fallthru
      _
    // Predicated region
    $region14: #{tpu_custom_call.1} parent=1 // pred_check
      _
    $region15: #{tpu_custom_call.1} parent=1 // pred_check_branch
      %74 = sbr.rel (0) target = $region17
    $region16: #{tpu_custom_call.1} parent=1 // pred_region
      %76 = vsyncadd [#allocation10], 0
      %s78 = sshll.u32 %s3, 4
      %s79 = int_to_ptr.hbm [resolvable:$true] %s78
      %s80 = sshll.u32 [#allocation9], 4
      %s81 = int_to_ptr.vmem [resolvable:$true] %s80
      %83 = dma.hbm_to_vmem [thread:$0]  %s79, 128, %s81, [#allocation10]
    $region17: #{tpu_custom_call.1} parent=1 // pred_fallthru
      _
    // Predicated region
    $region18: #{tpu_custom_call.1} parent=1 // pred_check
      _
    $region19: #{tpu_custom_call.1} parent=1 // pred_check_branch
      %85 = sbr.rel (0) target = $region21
    $region20: #{tpu_custom_call.1} parent=1 // pred_region
      _
    $region21: #{tpu_custom_call.1} parent=1 // pred_fallthru
      _
    // Predicated region
    $region22: #{tpu_custom_call.1} parent=1 // pred_check
      _
    $region23: #{tpu_custom_call.1} parent=1 // pred_check_branch
      %87 = sbr.rel (0) target = $region25
    $region24: #{tpu_custom_call.1} parent=1 // pred_region
      %89 = vsyncadd [#allocation10], 0
      %s90 = sshll.u32 %s5, 4
      %s91 = int_to_ptr.hbm [resolvable:$true] %s90
      %s92 = sshll.u32 [#allocation11], 4
      %s93 = int_to_ptr.vmem [resolvable:$true] %s92
      %98 = dma.hbm_to_vmem [thread:$0]  %s91, 256, %s93, [#allocation10], 128, 128, 8
    $region25: #{tpu_custom_call.1} parent=1 // pred_fallthru
      _
    // Predicated region
    $region26: #{tpu_custom_call.1} parent=1 // pred_check
      _
    $region27: #{tpu_custom_call.1} parent=1 // pred_check_branch
      %100 = sbr.rel (0) target = $region29
    $region28: #{tpu_custom_call.1} parent=1 // pred_region
      %102 = vsyncadd [#allocation13], 0
      %s103 = sshll.u32 %s6, 4
      %s104 = int_to_ptr.hbm [resolvable:$true] %s103
      %s105 = sshll.u32 [#allocation12], 4
      %s106 = int_to_ptr.vmem [resolvable:$true] %s105
      %111 = dma.hbm_to_vmem [thread:$0]  %s104, 256, %s106, [#allocation13], 128, 128, 8
    $region29: #{tpu_custom_call.1} parent=1 // pred_fallthru
      _
    // Predicated region
    $region30: #{tpu_custom_call.1} parent=1 // pred_check
      _
    $region31: #{tpu_custom_call.1} parent=1 // pred_check_branch
      %113 = sbr.rel (0) target = $region33
    $region32: #{tpu_custom_call.1} parent=1 // pred_region
      _
    $region33: #{tpu_custom_call.1} parent=1 // pred_fallthru
      _
    // Predicated region
    $region34: #{tpu_custom_call.1} parent=1 // pred_check
      _
    $region35: #{tpu_custom_call.1} parent=1 // pred_check_branch
      %115 = sbr.rel (0) target = $region37
    $region36: #{tpu_custom_call.1} parent=1 // pred_region
      %117 = vsyncadd [#allocation13], 0
      %s119 = sshll.u32 %s8, 4
      %s120 = int_to_ptr.hbm [resolvable:$true] %s119
      %s121 = sshll.u32 [#allocation14], 4
      %s122 = int_to_ptr.vmem [resolvable:$true] %s121
      %124 = dma.hbm_to_vmem [thread:$0]  %s120, 64, %s122, [#allocation13]
    $region37: #{tpu_custom_call.1} parent=1 // pred_fallthru
      _
    // Predicated region
    $region38: #{tpu_custom_call.1} parent=1 // pred_check
      _
    $region39: #{tpu_custom_call.1} parent=1 // pred_check_branch
      %126 = sbr.rel (0) target = $region41
    $region40: #{tpu_custom_call.1} parent=1 // pred_region
      %128 = vsyncadd [#allocation4], 0
      %s130 = sshll.u32 %s9, 4
      %s131 = int_to_ptr.hbm [resolvable:$true] %s130
      %133 = dma.hbm_to_smem %s131, 16, [#allocation15], [#allocation4]
    $region41: #{tpu_custom_call.1} parent=1 // pred_fallthru
      _
    // Predicated region
    $region42: #{tpu_custom_call.1} parent=1 // pred_check
      _
    $region43: #{tpu_custom_call.1} parent=1 // pred_check_branch
      %135 = sbr.rel (0) target = $region45
    $region44: #{tpu_custom_call.1} parent=1 // pred_region
      %137 = vsyncadd [#allocation17], 0
      %s139 = sshll.u32 %s10, 4
      %s140 = int_to_ptr.hbm [resolvable:$true] %s139
      %s141 = sshll.u32 [#allocation16], 4
      %s142 = int_to_ptr.vmem [resolvable:$true] %s141
      %144 = dma.hbm_to_vmem [thread:$0]  %s140, 64, %s142, [#allocation17]
    $region45: #{tpu_custom_call.1} parent=1 // pred_fallthru
      _
    // Predicated region
    $region46: #{tpu_custom_call.1} parent=1 // pred_check
      _
    $region47: #{tpu_custom_call.1} parent=1 // pred_check_branch
      %146 = sbr.rel (0) target = $region49
    $region48: #{tpu_custom_call.1} parent=1 // pred_region
      %148 = vsyncadd [#allocation17], 0
      %s150 = sshll.u32 %s11, 4
      %s151 = int_to_ptr.hbm [resolvable:$true] %s150
      %s152 = sshll.u32 [#allocation18], 4
      %s153 = int_to_ptr.vmem [resolvable:$true] %s152
      %155 = dma.hbm_to_vmem [thread:$0]  %s151, 64, %s153, [#allocation17]
    $region49: #{tpu_custom_call.1} parent=1 // pred_fallthru
      _
    // Predicated region
    $region50: #{tpu_custom_call.1} parent=1 // pred_check
      _
    $region51: #{tpu_custom_call.1} parent=1 // pred_check_branch
      %157 = sbr.rel (0) target = $region53
    $region52: #{tpu_custom_call.1} parent=1 // pred_region
      %159 = vsyncadd [#allocation20], 0
      %s161 = sshll.u32 %s12, 4
      %s162 = int_to_ptr.hbm [resolvable:$true] %s161
      %s163 = sshll.u32 [#allocation19], 4
      %s164 = int_to_ptr.vmem [resolvable:$true] %s163
      %166 = dma.hbm_to_vmem [thread:$0]  %s162, 64, %s164, [#allocation20]
    $region53: #{tpu_custom_call.1} parent=1 // pred_fallthru
      _
    // Predicated region
    $region54: #{tpu_custom_call.1} parent=1 // pred_check
      _
    $region55: #{tpu_custom_call.1} parent=1 // pred_check_branch
      %168 = sbr.rel (0) target = $region57
    $region56: #{tpu_custom_call.1} parent=1 // pred_region
      %170 = vsyncadd [#allocation20], 0
      %s172 = sshll.u32 %s13, 4
      %s173 = int_to_ptr.hbm [resolvable:$true] %s172
      %s174 = sshll.u32 [#allocation21], 4
      %s175 = int_to_ptr.vmem [resolvable:$true] %s174
      %177 = dma.hbm_to_vmem [thread:$0]  %s173, 64, %s175, [#allocation20]
    $region57: #{tpu_custom_call.1} parent=1 // pred_fallthru
      _
    // Predicated region
    $region58: #{tpu_custom_call.1} parent=1 // pred_check
      _
    $region59: #{tpu_custom_call.1} parent=1 // pred_check_branch
      %179 = sbr.rel (0) target = $region61
    $region60: #{tpu_custom_call.1} parent=1 // pred_region
      %181 = vsyncadd [#allocation23], 0
      %s183 = sshll.u32 %s14, 4
      %s184 = int_to_ptr.hbm [resolvable:$true] %s183
      %s185 = sshll.u32 [#allocation22], 4
      %s186 = int_to_ptr.vmem [resolvable:$true] %s185
      %188 = dma.hbm_to_vmem [thread:$0]  %s184, 64, %s186, [#allocation23]
    $region61: #{tpu_custom_call.1} parent=1 // pred_fallthru
      _
    // Predicated region
    $region62: #{tpu_custom_call.1} parent=1 // pred_check
      _
    $region63: #{tpu_custom_call.1} parent=1 // pred_check_branch
      %190 = sbr.rel (0) target = $region65
    $region64: #{tpu_custom_call.1} parent=1 // pred_region
      %192 = vsyncadd [#allocation25], 0
      %s194 = sshll.u32 %s15, 4
      %s195 = int_to_ptr.hbm [resolvable:$true] %s194
      %197 = dma.hbm_to_smem %s195, 16, [#allocation24], [#allocation25]
    $region65: #{tpu_custom_call.1} parent=1 // pred_fallthru
      _
    // Predicated region
    $region66: #{tpu_custom_call.1} parent=1 // pred_check
      _
    $region67: #{tpu_custom_call.1} parent=1 // pred_check_branch
      %199 = sbr.rel (0) target = $region69
    $region68: #{tpu_custom_call.1} parent=1 // pred_region
      _
    $region69: #{tpu_custom_call.1} parent=1 // pred_fallthru
      _
    // Predicated region
    $region70: #{tpu_custom_call.1} parent=1 // pred_check
      _
    $region71: #{tpu_custom_call.1} parent=1 // pred_check_branch
      %201 = sbr.rel (0) target = $region73
    $region72: #{tpu_custom_call.1} parent=1 // pred_region
      _
    $region73: #{tpu_custom_call.1} parent=1 // pred_fallthru
      _
    // Predicated region
    $region74: #{tpu_custom_call.1} parent=1 // pred_check
      _
    $region75: #{tpu_custom_call.1} parent=1 // pred_check_branch
      %203 = sbr.rel (0) target = $region77
    $region76: #{tpu_custom_call.1} parent=1 // pred_region
      _
    $region77: #{tpu_custom_call.1} parent=1 // pred_fallthru
      _
    // Predicated region
    $region78: #{tpu_custom_call.1} parent=1 // pred_check
      _
    $region79: #{tpu_custom_call.1} parent=1 // pred_check_branch
      %205 = sbr.rel (0) target = $region81
    $region80: #{tpu_custom_call.1} parent=1 // pred_region
      %207 = vsyncadd [#allocation23], 0
      %s208 = sshll.u32 %s19, 4
      %s209 = int_to_ptr.hbm [resolvable:$true] %s208
      %s210 = sshll.u32 [#allocation26], 4
      %s211 = int_to_ptr.vmem [resolvable:$true] %s210
      %216 = dma.hbm_to_vmem [thread:$0]  %s209, 256, %s211, [#allocation23], 128, 128, 8
    $region81: #{tpu_custom_call.1} parent=1 // pred_fallthru
      _
    // Predicated region
    $region82: #{tpu_custom_call.1} parent=1 // pred_check
      _
    $region83: #{tpu_custom_call.1} parent=1 // pred_check_branch
      %218 = sbr.rel (0) target = $region85
    $region84: #{tpu_custom_call.1} parent=1 // pred_region
      _
    $region85: #{tpu_custom_call.1} parent=1 // pred_fallthru
      _
    // Predicated region
    $region86: #{tpu_custom_call.1} parent=1 // pred_check
      _
    $region87: #{tpu_custom_call.1} parent=1 // pred_check_branch
      %220 = sbr.rel (0) target = $region89
    $region88: #{tpu_custom_call.1} parent=1 // pred_region
      %222 = dma.done [#allocation3], 256
    $region89: #{tpu_custom_call.1} parent=1 // pred_fallthru
      _
    // Predicated region
    $region90: #{tpu_custom_call.1} parent=1 // pred_check
      _
    $region91: #{tpu_custom_call.1} parent=1 // pred_check_branch
      %224 = sbr.rel (0) target = $region93
    $region92: #{tpu_custom_call.1} parent=1 // pred_region
      %226 = dma.done [#allocation7], 256
    $region93: #{tpu_custom_call.1} parent=1 // pred_fallthru
      _
    // Predicated region
    $region94: #{tpu_custom_call.1} parent=1 // pred_check
      _
    $region95: #{tpu_custom_call.1} parent=1 // pred_check_branch
      %228 = sbr.rel (0) target = $region97
    $region96: #{tpu_custom_call.1} parent=1 // pred_region
      %230 = dma.done [#allocation7], 128
    $region97: #{tpu_custom_call.1} parent=1 // pred_fallthru
      _
    // Predicated region
    $region98: #{tpu_custom_call.1} parent=1 // pred_check
      _
    $region99: #{tpu_custom_call.1} parent=1 // pred_check_branch
      %232 = sbr.rel (0) target = $region101
    $region100: #{tpu_custom_call.1} parent=1 // pred_region
      %234 = dma.done [#allocation10], 128
    $region101: #{tpu_custom_call.1} parent=1 // pred_fallthru
      _
    // Predicated region
    $region102: #{tpu_custom_call.1} parent=1 // pred_check
      _
    $region103: #{tpu_custom_call.1} parent=1 // pred_check_branch
      %236 = sbr.rel (0) target = $region105
    $region104: #{tpu_custom_call.1} parent=1 // pred_region
      %238 = dma.done [#allocation10], 256
    $region105: #{tpu_custom_call.1} parent=1 // pred_fallthru
      _
    // Predicated region
    $region106: #{tpu_custom_call.1} parent=1 // pred_check
      _
    $region107: #{tpu_custom_call.1} parent=1 // pred_check_branch
      %240 = sbr.rel (0) target = $region109
    $region108: #{tpu_custom_call.1} parent=1 // pred_region
      %242 = dma.done [#allocation13], 256
    $region109: #{tpu_custom_call.1} parent=1 // pred_fallthru
      _
    // Predicated region
    $region110: #{tpu_custom_call.1} parent=1 // pred_check
      _
    $region111: #{tpu_custom_call.1} parent=1 // pred_check_branch
      %244 = sbr.rel (0) target = $region113
    $region112: #{tpu_custom_call.1} parent=1 // pred_region
      %246 = dma.done [#allocation13], 64
    $region113: #{tpu_custom_call.1} parent=1 // pred_fallthru
      _
    // Predicated region
    $region114: #{tpu_custom_call.1} parent=1 // pred_check
      _
    $region115: #{tpu_custom_call.1} parent=1 // pred_check_branch
      %248 = sbr.rel (0) target = $region117
    $region116: #{tpu_custom_call.1} parent=1 // pred_region
      %250 = dma.done [#allocation4], 16
    $region117: #{tpu_custom_call.1} parent=1 // pred_fallthru
      _
    // Predicated region
    $region118: #{tpu_custom_call.1} parent=1 // pred_check
      _
    $region119: #{tpu_custom_call.1} parent=1 // pred_check_branch
      %252 = sbr.rel (0) target = $region121
    $region120: #{tpu_custom_call.1} parent=1 // pred_region
      %254 = dma.done [#allocation17], 64
    $region121: #{tpu_custom_call.1} parent=1 // pred_fallthru
      _
    // Predicated region
    $region122: #{tpu_custom_call.1} parent=1 // pred_check
      _
    $region123: #{tpu_custom_call.1} parent=1 // pred_check_branch
      %256 = sbr.rel (0) target = $region125
    $region124: #{tpu_custom_call.1} parent=1 // pred_region
      %258 = dma.done [#allocation17], 64
    $region125: #{tpu_custom_call.1} parent=1 // pred_fallthru
      _
    // Predicated region
    $region126: #{tpu_custom_call.1} parent=1 // pred_check
      _
    $region127: #{tpu_custom_call.1} parent=1 // pred_check_branch
      %260 = sbr.rel (0) target = $region129
    $region128: #{tpu_custom_call.1} parent=1 // pred_region
      %262 = dma.done [#allocation20], 64
    $region129: #{tpu_custom_call.1} parent=1 // pred_fallthru
      _
    // Predicated region
    $region130: #{tpu_custom_call.1} parent=1 // pred_check
      _
    $region131: #{tpu_custom_call.1} parent=1 // pred_check_branch
      %264 = sbr.rel (0) target = $region133
    $region132: #{tpu_custom_call.1} parent=1 // pred_region
      %266 = dma.done [#allocation20], 64
    $region133: #{tpu_custom_call.1} parent=1 // pred_fallthru
      _
    // Predicated region
    $region134: #{tpu_custom_call.1} parent=1 // pred_check
      _
    $region135: #{tpu_custom_call.1} parent=1 // pred_check_branch
      %268 = sbr.rel (0) target = $region137
    $region136: #{tpu_custom_call.1} parent=1 // pred_region
      %270 = dma.done [#allocation23], 64
    $region137: #{tpu_custom_call.1} parent=1 // pred_fallthru
      _
    // Predicated region
    $region138: #{tpu_custom_call.1} parent=1 // pred_check
      _
    $region139: #{tpu_custom_call.1} parent=1 // pred_check_branch
      %272 = sbr.rel (0) target = $region141
    $region140: #{tpu_custom_call.1} parent=1 // pred_region
      %274 = dma.done [#allocation25], 16
    $region141: #{tpu_custom_call.1} parent=1 // pred_fallthru
      _
    // Predicated region
    $region142: #{tpu_custom_call.1} parent=1 // pred_check
      _
    $region143: #{tpu_custom_call.1} parent=1 // pred_check_branch
      %276 = sbr.rel (0) target = $region145
    $region144: #{tpu_custom_call.1} parent=1 // pred_region
      %278 = dma.done [#allocation23], 256
    $region145: #{tpu_custom_call.1} parent=1 // pred_fallthru
      _
    %279 = sfence
    %v280 = vld [vmem:[#allocation14] sm:$0xf]
    %v281 = vld [vmem:[#allocation16] sm:$0xf]
    %v282 = vld [vmem:[#allocation18] sm:$0xf]
    %v283 = vld [vmem:[#allocation19] sm:$0xf]
    %v284 = vld [vmem:[#allocation21] sm:$0xf]
    %v285 = vld [vmem:[#allocation22] sm:$0xf]
    %v286 = vld [vmem:[%s20] sm:$0xff]
    %v287 = vld [vmem:[%s20 + $0x8] sm:$0xff]
    %v288 = vld [vmem:[#allocation2] sm:$0xff]
    %v289 = vld [vmem:[#allocation2 + $0x8] sm:$0xff]
    %v290 = vld [vmem:[%s4] sm:$0xff]
    %v291 = vld [vmem:[%s4 + $0x8] sm:$0xff]
    %v292 = vld [vmem:[%s4 + $0x10] sm:$0xff]
    %v293 = vperm.slane %v280, 0
    %vm294 = vcmask 195584
    %v296 = vsel %vm294, %v288, 0
    %v299 = vsel %vm294, %v289, 0
    %301 = vmatpush.msra.mxu0 0.0
    %302 = vmatpush.msra.mxu0 0.0
    %303 = vmatpush.msra.mxu0 0.0
    %304 = vmatpush.msra.mxu0 0.0
    %305 = vmatpush.msra.mxu0 0.0
    %306 = vmatpush.msra.mxu0 0.0
    %307 = vmatpush.msra.mxu0 0.0
    %308 = vmatpush.msra.mxu0 0.0
    %309 = vmatpush.msra.mxu0 0.0
    %310 = vmatpush.msra.mxu0 0.0
    %311 = vmatpush.msra.mxu0 0.0
    %312 = vmatpush.msra.mxu0 0.0
    %313 = vmatpush.msra.mxu0 0.0
    %314 = vmatpush.msra.mxu0 %v292
    %315 = vmatpush.msra.mxu0 %v291
    %316 = vmatpush.msra.mxu0 %v290
    %317 = vmatmul.f32.gmra.mxu0 %v296
    %v318 = vpop.f32.mrf.mxu0
    %v319 = vadd.f32 %v293, %v318
    %320 = vmatmul.f32.gmra.mxu0 %v299
    %v321 = vpop.f32.mrf.mxu0
    %v322 = vadd.f32 %v293, %v321
    %323 = vdwg.mxu0
    %s324 = sld [smem:[#allocation15]]
    %vm325 = vcmp.ge.f32.partialorder %v319, 0.0
    %vm326 = vcmp.ge.f32.partialorder %v322, 0.0
    %v327 = vstv %s324
    %v328 = vmul.f32 %v327, %v319
    %v329 = vmul.f32 %v327, %v322
    %v330 = vsel %vm325, %v319, %v328
    %v331 = vsel %vm326, %v322, %v329
    %v332 = vld [vmem:[#allocation6] sm:$0xff]
    %v333 = vld [vmem:[#allocation6 + $0x8] sm:$0xff]
    %v334 = vld [vmem:[#allocation11] sm:$0xff]
    %v335 = vld [vmem:[#allocation11 + $0x8] sm:$0xff]
    %v336 = vperm.slane %v280, 1
    %vm337 = vcmask 130048
    %v339 = vsel %vm337, %v332, 0
    %v342 = vsel %vm337, %v333, 0
    %344 = vmatpush.msra.mxu0 0.0
    %345 = vmatpush.msra.mxu0 0.0
    %346 = vmatpush.msra.mxu0 0.0
    %347 = vmatpush.msra.mxu0 0.0
    %348 = vmatpush.msra.mxu0 0.0
    %349 = vmatpush.msra.mxu0 0.0
    %350 = vmatpush.msra.mxu0 0.0
    %351 = vmatpush.msra.mxu0 0.0
    %352 = vmatpush.msra.mxu0 0.0
    %353 = vmatpush.msra.mxu0 0.0
    %354 = vmatpush.msra.mxu0 0.0
    %355 = vmatpush.msra.mxu0 0.0
    %356 = vmatpush.msra.mxu0 0.0
    %357 = vmatpush.msra.mxu0 0.0
    %358 = vmatpush.msra.mxu0 %v335
    %359 = vmatpush.msra.mxu0 %v334
    %360 = vmatmul.f32.gmra.mxu0 %v339
    %v361 = vpop.f32.mrf.mxu0
    %v362 = vadd.f32 %v336, %v361
    %363 = vmatmul.f32.gmra.mxu0 %v342
    %v364 = vpop.f32.mrf.mxu0
    %v365 = vadd.f32 %v336, %v364
    %366 = vdwg.mxu0
    %s367 = sld [smem:[#allocation15 + $0x1]]
    %vm368 = vcmp.ge.f32.partialorder %v362, 0.0
    %vm369 = vcmp.ge.f32.partialorder %v365, 0.0
    %v370 = vstv %s367
    %v371 = vmul.f32 %v370, %v362
    %v372 = vmul.f32 %v370, %v365
    %v373 = vsel %vm368, %v362, %v371
    %v374 = vsel %vm369, %v365, %v372
    %v375 = vld [vmem:[#allocation8] sm:$0xff]
    %v376 = vld [vmem:[#allocation12] sm:$0xff]
    %v377 = vld [vmem:[#allocation12 + $0x8] sm:$0xf]
    %v378 = vperm.slane %v280, 2
    %vm379 = vcmask 97280
    %v381 = vsel %vm379, %v375, 0
    %vm383 = vcmask 1043456
    %v385 = vsel %vm383, %v377, 0
    %387 = vmatpush.msra.mxu0 0.0
    %388 = vmatpush.msra.mxu0 0.0
    %389 = vmatpush.msra.mxu0 0.0
    %390 = vmatpush.msra.mxu0 0.0
    %391 = vmatpush.msra.mxu0 0.0
    %392 = vmatpush.msra.mxu0 0.0
    %393 = vmatpush.msra.mxu0 0.0
    %394 = vmatpush.msra.mxu0 0.0
    %395 = vmatpush.msra.mxu0 0.0
    %396 = vmatpush.msra.mxu0 0.0
    %397 = vmatpush.msra.mxu0 0.0
    %398 = vmatpush.msra.mxu0 0.0
    %399 = vmatpush.msra.mxu0 0.0
    %400 = vmatpush.msra.mxu0 0.0
    %401 = vmatpush.msra.mxu0 %v385
    %402 = vmatpush.msra.mxu0 %v376
    %403 = vmatmul.f32.gmra.mxu0 %v381
    %v404 = vpop.f32.mrf.mxu0
    %v405 = vadd.f32 %v378, %v404
    %406 = vdwg.mxu0
    %s407 = sld [smem:[#allocation15 + $0x2]]
    %vm408 = vcmp.ge.f32.partialorder %v405, 0.0
    %v409 = vstv %s407
    %v410 = vmul.f32 %v409, %v405
    %v411 = vsel %vm408, %v405, %v410
    %v412 = vld [vmem:[#allocation9] sm:$0xff]
    %v413 = vld [vmem:[%s7] sm:$0xff]
    %v414 = vld [vmem:[%s7 + $0x8] sm:$0xff]
    %v415 = vld [vmem:[%s7 + $0x10] sm:$0xf]
    %v416 = vperm.slane %v280, 3
    %vm417 = vcmask 162816
    %v419 = vsel %vm417, %v412, 0
    %v422 = vsel %vm383, %v415, 0
    %424 = vmatpush.msra.mxu0 0.0
    %425 = vmatpush.msra.mxu0 0.0
    %426 = vmatpush.msra.mxu0 0.0
    %427 = vmatpush.msra.mxu0 0.0
    %428 = vmatpush.msra.mxu0 0.0
    %429 = vmatpush.msra.mxu0 0.0
    %430 = vmatpush.msra.mxu0 0.0
    %431 = vmatpush.msra.mxu0 0.0
    %432 = vmatpush.msra.mxu0 0.0
    %433 = vmatpush.msra.mxu0 0.0
    %434 = vmatpush.msra.mxu0 0.0
    %435 = vmatpush.msra.mxu0 0.0
    %436 = vmatpush.msra.mxu0 0.0
    %437 = vmatpush.msra.mxu0 %v422
    %438 = vmatpush.msra.mxu0 %v414
    %439 = vmatpush.msra.mxu0 %v413
    %440 = vmatmul.f32.gmra.mxu0 %v419
    %v441 = vpop.f32.mrf.mxu0
    %v442 = vadd.f32 %v416, %v441
    %443 = vdwg.mxu0
    %s444 = sld [smem:[#allocation15 + $0x3]]
    %vm445 = vcmp.ge.f32.partialorder %v442, 0.0
    %v446 = vstv %s444
    %v447 = vmul.f32 %v446, %v442
    %v448 = vsel %vm445, %v442, %v447
    %v449 = vld [vmem:[#allocation26] sm:$0xff]
    %v450 = vld [vmem:[#allocation26 + $0x8] sm:$0xff]
    %v452 = vrot.slane %v281, 3
    %454 = vmatpush.xpose.msra.mxu0 0.0
    %455 = vmatpush.xpose.msra.mxu0 0.0
    %456 = vmatpush.xpose.msra.mxu0 0.0
    %457 = vmatpush.xpose.msra.mxu0 0.0
    %458 = vmatpush.xpose.msra.mxu0 0.0
    %459 = vmatpush.xpose.msra.mxu0 0.0
    %460 = vmatpush.xpose.msra.mxu0 0.0
    %461 = vmatpush.xpose.msra.mxu0 0.0
    %462 = vmatpush.xpose.msra.mxu0 0.0
    %463 = vmatpush.xpose.msra.mxu0 0.0
    %464 = vmatpush.xpose.msra.mxu0 0.0
    %465 = vmatpush.xpose.msra.mxu0 0.0
    %466 = vmatpush.xpose.msra.mxu0 0.0
    %467 = vmatpush.xpose.msra.mxu0 0.0
    %468 = vmatpush.xpose.msra.mxu0 %v331
    %469 = vmatpush.xpose.msra.mxu0 %v330
    %470 = vmatmul.f32.gmra.mxu0 %v452
    %v471 = vpop.f32.mrf.mxu0
    %v472 = vadd.f32 0.0, %v471
    %473 = vdwg.mxu0
    %v474 = vperm.slane %v282, 3
    %v475 = vmul.f32 %v373, %v474
    %v476 = vmul.f32 %v374, %v474
    %477 = vadd.xlane.f32.xlu0 %v475
    %v478 = vpop.xlane.xlu0 %477
    %479 = vadd.xlane.f32.xlu0 %v476
    %v480 = vpop.xlane.xlu0 %479
    %v481 = vperm.slane %v472, 0
    %v482 = vadd.f32 %v478, %v481
    %v483 = vadd.f32 %v480, %v481
    %vm484 = vcmp.ge.f32.partialorder %v482, 0.0
    %vm485 = vcmp.ge.f32.partialorder %v483, 0.0
    %v486 = vmul.f32 %v482, 0.01
    %v487 = vmul.f32 %v483, 0.01
    %v488 = vsel %vm484, %v482, %v486
    %v489 = vsel %vm485, %v483, %v487
    %vm490 = vcmp.gt.f32.partialorder %v449, 0.0
    %vm491 = vcmp.gt.f32.partialorder %v450, 0.0
    %v492 = vsel %vm490, %v488, -1e+30
    %v493 = vsel %vm491, %v489, -1e+30
    %v494 = vsel %vm337, %v492, -inf
    %495 = vmax.xlane.f32.xlu0 %v494
    %v496 = vpop.xlane.xlu0 %495
    %v497 = vsel %vm337, %v493, -inf
    %498 = vmax.xlane.f32.xlu0 %v497
    %v499 = vpop.xlane.xlu0 %498
    %v500 = vsub.f32 %v492, %v496
    %v501 = vsub.f32 %v493, %v499
    %v502 = vmul.f32 %v500, 1.442695
    %v503 = vpow.pop %v502
    %v504 = vmul.f32 %v501, 1.442695
    %v505 = vpow.pop %v504
    %v506 = vmul.f32 %v503, %v449
    %v507 = vmul.f32 %v505, %v450
    %v508 = vsel %vm337, %v506, 0.0
    %509 = vadd.xlane.f32.xlu0 %v508
    %v510 = vpop.xlane.xlu0 %509
    %v511 = vsel %vm337, %v507, 0.0
    %512 = vadd.xlane.f32.xlu0 %v511
    %v513 = vpop.xlane.xlu0 %512
    %vm514 = vcmp.eq.f32.partialorder %v510, 0.0
    %vm515 = vcmp.eq.f32.partialorder %v513, 0.0
    %v516 = vsel %vm514, 1.0, %v510
    %v517 = vsel %vm515, 1.0, %v513
    %v518 = vrcp.pop %v516
    %v519 = vmul.f32 %v516, %v518
    %v520 = vsub.f32 1.0, %v519
    %v521 = vmul.f32 %v518, %v520
    %v522 = vadd.f32 %v518, %v521
    %vm523 = vweird.f32 %v516
    %vm524 = vweird.f32 %v518
    %vm525 = vmor %vm523, %vm524
    %v526 = vsel %vm525, %v518, %v522
    %v527 = vand.u32 2147483647, %v516
    %vm528 = vcmp.eq.f32.partialorder %v527, 8.507059e+37
    %v529 = vand.u32 %v516, 2147483648
    %v530 = vor.u32 1.1754944e-38, %v529
    %v531 = vsel %vm528, %v530, %v526
    %v532 = vmul.f32 %v506, %v531
    %v533 = vrcp.pop %v517
    %v534 = vmul.f32 %v517, %v533
    %v535 = vsub.f32 1.0, %v534
    %v536 = vmul.f32 %v533, %v535
    %v537 = vadd.f32 %v533, %v536
    %vm538 = vweird.f32 %v517
    %vm539 = vweird.f32 %v533
    %vm540 = vmor %vm538, %vm539
    %v541 = vsel %vm540, %v533, %v537
    %v542 = vand.u32 2147483647, %v517
    %vm543 = vcmp.eq.f32.partialorder %v542, 8.507059e+37
    %v544 = vand.u32 %v517, 2147483648
    %v545 = vor.u32 1.1754944e-38, %v544
    %v546 = vsel %vm543, %v545, %v541
    %v547 = vmul.f32 %v507, %v546
    %v548 = vperm.slane %v283, 3
    %v550 = vsel %vm337, %v532, 0
    %v553 = vsel %vm337, %v547, 0
    %555 = vmatpush.msra.mxu0 0.0
    %556 = vmatpush.msra.mxu0 0.0
    %557 = vmatpush.msra.mxu0 0.0
    %558 = vmatpush.msra.mxu0 0.0
    %559 = vmatpush.msra.mxu0 0.0
    %560 = vmatpush.msra.mxu0 0.0
    %561 = vmatpush.msra.mxu0 0.0
    %562 = vmatpush.msra.mxu0 0.0
    %563 = vmatpush.msra.mxu0 0.0
    %564 = vmatpush.msra.mxu0 0.0
    %565 = vmatpush.msra.mxu0 0.0
    %566 = vmatpush.msra.mxu0 0.0
    %567 = vmatpush.msra.mxu0 0.0
    %568 = vmatpush.msra.mxu0 0.0
    %569 = vmatpush.msra.mxu0 %v331
    %570 = vmatpush.msra.mxu0 %v330
    %571 = vmatmul.f32.gmra.mxu0 %v550
    %v572 = vpop.f32.mrf.mxu0
    %v573 = vadd.f32 %v548, %v572
    %574 = vmatmul.f32.gmra.mxu0 %v553
    %v575 = vpop.f32.mrf.mxu0
    %v576 = vadd.f32 %v548, %v575
    %577 = vdwg.mxu0
    %v578 = vadd.f32 %v573, %v576
    %v579 = vrot.slane %v578, 4
    %v580 = vadd.f32 %v578, %v579
    %v581 = vrot.slane %v580, 2
    %v582 = vadd.f32 %v580, %v581
    %v583 = vrot.slane %v582, 1
    %v584 = vadd.f32 %v582, %v583
    %v585 = vrcp.pop 16.0
    %v586 = vmul.f32 16.0, %v585
    %v587 = vsub.f32 1.0, %v586
    %v588 = vmul.f32 %v585, %v587
    %v589 = vadd.f32 %v585, %v588
    %vm590 = vweird.f32 %v585
    %v591 = vsel %vm590, %v585, %v589
    %v592 = vmul.f32 %v584, %v591
    %v593 = vsub.f32 %v573, %v592
    %v594 = vsub.f32 %v576, %v592
    %v595 = vmul.f32 %v593, %v593
    %v596 = vmul.f32 %v594, %v594
    %v597 = vadd.f32 %v595, %v596
    %v598 = vrot.slane %v597, 4
    %v599 = vadd.f32 %v597, %v598
    %v600 = vrot.slane %v599, 2
    %v601 = vadd.f32 %v599, %v600
    %v602 = vrot.slane %v601, 1
    %v603 = vadd.f32 %v601, %v602
    %v604 = vmul.f32 %v603, %v591
    %v605 = vadd.f32 %v604, 1e-05
    %v606 = vrsqrt.pop %v605
    %v607 = vmul.f32 %v606, %v605
    %v608 = vmul.f32 %v607, %v606
    %v609 = vmul.f32 0.5, %v608
    %v610 = vsub.f32 1.5, %v609
    %v611 = vmul.f32 %v606, %v610
    %vm612 = vweird.f32 %v605
    %vm613 = vweird.f32 %v606
    %vm614 = vmor %vm612, %vm613
    %v615 = vsel %vm614, %v606, %v611
    %v616 = vmul.f32 %v593, %v615
    %v617 = vmul.f32 %v594, %v615
    %v618 = vperm.slane %v284, 3
    %v619 = vmul.f32 %v616, %v618
    %v620 = vmul.f32 %v617, %v618
    %v621 = vperm.slane %v285, 3
    %v622 = vadd.f32 %v619, %v621
    %v623 = vadd.f32 %v620, %v621
    %s624 = sld [smem:[#allocation24 + $0x3]]
    %vm625 = vcmp.ge.f32.partialorder %v622, 0.0
    %vm626 = vcmp.ge.f32.partialorder %v623, 0.0
    %v627 = vstv %s624
    %v628 = vmul.f32 %v627, %v622
    %v629 = vmul.f32 %v627, %v623
    %v630 = vsel %vm625, %v622, %v628
    %v631 = vsel %vm626, %v623, %v629
    %v632 = vld [vmem:[%s16] sm:$0xff]
    %v633 = vld [vmem:[%s16 + $0x8] sm:$0xff]
    %v634 = vld [vmem:[%s17] sm:$0xff]
    %v635 = vld [vmem:[%s17 + $0x8] sm:$0xff]
    %v636 = vld [vmem:[%s18] sm:$0xff]
    %v637 = vld [vmem:[%s18 + $0x8] sm:$0xff]
    %638 = vmatpush.xpose.msra.mxu0 0.0
    %639 = vmatpush.xpose.msra.mxu0 0.0
    %640 = vmatpush.xpose.msra.mxu0 0.0
    %641 = vmatpush.xpose.msra.mxu0 0.0
    %642 = vmatpush.xpose.msra.mxu0 0.0
    %643 = vmatpush.xpose.msra.mxu0 0.0
    %644 = vmatpush.xpose.msra.mxu0 0.0
    %645 = vmatpush.xpose.msra.mxu0 0.0
    %646 = vmatpush.xpose.msra.mxu0 0.0
    %647 = vmatpush.xpose.msra.mxu0 0.0
    %648 = vmatpush.xpose.msra.mxu0 0.0
    %649 = vmatpush.xpose.msra.mxu0 0.0
    %650 = vmatpush.xpose.msra.mxu0 0.0
    %651 = vmatpush.xpose.msra.mxu0 0.0
    %652 = vmatpush.xpose.msra.mxu0 %v631
    %653 = vmatpush.xpose.msra.mxu0 %v630
    %654 = vmatmul.f32.gmra.mxu0 %v281
    %v655 = vpop.f32.mrf.mxu0
    %v656 = vadd.f32 0.0, %v655
    %657 = vdwg.mxu0
    %v658 = vperm.slane %v282, 0
    %v659 = vmul.f32 %v330, %v658
    %v660 = vmul.f32 %v331, %v658
    %661 = vadd.xlane.f32.xlu0 %v659
    %v662 = vpop.xlane.xlu0 %661
    %663 = vadd.xlane.f32.xlu0 %v660
    %v664 = vpop.xlane.xlu0 %663
    %v665 = vperm.slane %v656, 0
    %v666 = vadd.f32 %v662, %v665
    %v667 = vadd.f32 %v664, %v665
    %vm668 = vcmp.ge.f32.partialorder %v666, 0.0
    %vm669 = vcmp.ge.f32.partialorder %v667, 0.0
    %v670 = vmul.f32 %v666, 0.01
    %v671 = vmul.f32 %v667, 0.01
    %v672 = vsel %vm668, %v666, %v670
    %v673 = vsel %vm669, %v667, %v671
    %vm674 = vcmp.gt.f32.partialorder %v632, 0.0
    %vm675 = vcmp.gt.f32.partialorder %v633, 0.0
    %v676 = vsel %vm674, %v672, -1e+30
    %v677 = vsel %vm675, %v673, -1e+30
    %v678 = vsel %vm337, %v676, -inf
    %679 = vmax.xlane.f32.xlu0 %v678
    %v680 = vpop.xlane.xlu0 %679
    %v681 = vsel %vm337, %v677, -inf
    %682 = vmax.xlane.f32.xlu0 %v681
    %v683 = vpop.xlane.xlu0 %682
    %v684 = vsub.f32 %v676, %v680
    %v685 = vsub.f32 %v677, %v683
    %v686 = vmul.f32 %v684, 1.442695
    %v687 = vpow.pop %v686
    %v688 = vmul.f32 %v685, 1.442695
    %v689 = vpow.pop %v688
    %v690 = vmul.f32 %v687, %v632
    %v691 = vmul.f32 %v689, %v633
    %v692 = vsel %vm337, %v690, 0.0
    %693 = vadd.xlane.f32.xlu0 %v692
    %v694 = vpop.xlane.xlu0 %693
    %v695 = vsel %vm337, %v691, 0.0
    %696 = vadd.xlane.f32.xlu0 %v695
    %v697 = vpop.xlane.xlu0 %696
    %vm698 = vcmp.eq.f32.partialorder %v694, 0.0
    %vm699 = vcmp.eq.f32.partialorder %v697, 0.0
    %v700 = vsel %vm698, 1.0, %v694
    %v701 = vsel %vm699, 1.0, %v697
    %v702 = vrcp.pop %v700
    %v703 = vmul.f32 %v700, %v702
    %v704 = vsub.f32 1.0, %v703
    %v705 = vmul.f32 %v702, %v704
    %v706 = vadd.f32 %v702, %v705
    %vm707 = vweird.f32 %v700
    %vm708 = vweird.f32 %v702
    %vm709 = vmor %vm707, %vm708
    %v710 = vsel %vm709, %v702, %v706
    %v711 = vand.u32 2147483647, %v700
    %vm712 = vcmp.eq.f32.partialorder %v711, 8.507059e+37
    %v713 = vand.u32 %v700, 2147483648
    %v714 = vor.u32 1.1754944e-38, %v713
    %v715 = vsel %vm712, %v714, %v710
    %v716 = vmul.f32 %v690, %v715
    %v717 = vrcp.pop %v701
    %v718 = vmul.f32 %v701, %v717
    %v719 = vsub.f32 1.0, %v718
    %v720 = vmul.f32 %v717, %v719
    %v721 = vadd.f32 %v717, %v720
    %vm722 = vweird.f32 %v701
    %vm723 = vweird.f32 %v717
    %vm724 = vmor %vm722, %vm723
    %v725 = vsel %vm724, %v717, %v721
    %v726 = vand.u32 2147483647, %v701
    %vm727 = vcmp.eq.f32.partialorder %v726, 8.507059e+37
    %v728 = vand.u32 %v701, 2147483648
    %v729 = vor.u32 1.1754944e-38, %v728
    %v730 = vsel %vm727, %v729, %v725
    %v731 = vmul.f32 %v691, %v730
    %v732 = vperm.slane %v283, 0
    %v734 = vsel %vm337, %v716, 0
    %v737 = vsel %vm337, %v731, 0
    %739 = vmatpush.msra.mxu0 0.0
    %740 = vmatpush.msra.mxu0 0.0
    %741 = vmatpush.msra.mxu0 0.0
    %742 = vmatpush.msra.mxu0 0.0
    %743 = vmatpush.msra.mxu0 0.0
    %744 = vmatpush.msra.mxu0 0.0
    %745 = vmatpush.msra.mxu0 0.0
    %746 = vmatpush.msra.mxu0 0.0
    %747 = vmatpush.msra.mxu0 0.0
    %748 = vmatpush.msra.mxu0 0.0
    %749 = vmatpush.msra.mxu0 0.0
    %750 = vmatpush.msra.mxu0 0.0
    %751 = vmatpush.msra.mxu0 0.0
    %752 = vmatpush.msra.mxu0 0.0
    %753 = vmatpush.msra.mxu0 %v631
    %754 = vmatpush.msra.mxu0 %v630
    %755 = vmatmul.f32.gmra.mxu0 %v734
    %v756 = vpop.f32.mrf.mxu0
    %v757 = vadd.f32 %v732, %v756
    %758 = vmatmul.f32.gmra.mxu0 %v737
    %v759 = vpop.f32.mrf.mxu0
    %v760 = vadd.f32 %v732, %v759
    %761 = vdwg.mxu0
    %v762 = vadd.f32 %v757, %v760
    %v763 = vrot.slane %v762, 4
    %v764 = vadd.f32 %v762, %v763
    %v765 = vrot.slane %v764, 2
    %v766 = vadd.f32 %v764, %v765
    %v767 = vrot.slane %v766, 1
    %v768 = vadd.f32 %v766, %v767
    %v769 = vmul.f32 %v768, %v591
    %v770 = vsub.f32 %v757, %v769
    %v771 = vsub.f32 %v760, %v769
    %v772 = vmul.f32 %v770, %v770
    %v773 = vmul.f32 %v771, %v771
    %v774 = vadd.f32 %v772, %v773
    %v775 = vrot.slane %v774, 4
    %v776 = vadd.f32 %v774, %v775
    %v777 = vrot.slane %v776, 2
    %v778 = vadd.f32 %v776, %v777
    %v779 = vrot.slane %v778, 1
    %v780 = vadd.f32 %v778, %v779
    %v781 = vmul.f32 %v780, %v591
    %v782 = vadd.f32 %v781, 1e-05
    %v783 = vrsqrt.pop %v782
    %v784 = vmul.f32 %v783, %v782
    %v785 = vmul.f32 %v784, %v783
    %v786 = vmul.f32 0.5, %v785
    %v787 = vsub.f32 1.5, %v786
    %v788 = vmul.f32 %v783, %v787
    %vm789 = vweird.f32 %v782
    %vm790 = vweird.f32 %v783
    %vm791 = vmor %vm789, %vm790
    %v792 = vsel %vm791, %v783, %v788
    %v793 = vmul.f32 %v770, %v792
    %v794 = vmul.f32 %v771, %v792
    %v795 = vperm.slane %v284, 0
    %v796 = vmul.f32 %v793, %v795
    %v797 = vmul.f32 %v794, %v795
    %v798 = vperm.slane %v285, 0
    %v799 = vadd.f32 %v796, %v798
    %v800 = vadd.f32 %v797, %v798
    %s801 = sld [smem:[#allocation24]]
    %vm802 = vcmp.ge.f32.partialorder %v799, 0.0
    %vm803 = vcmp.ge.f32.partialorder %v800, 0.0
    %v804 = vstv %s801
    %v805 = vmul.f32 %v804, %v799
    %v806 = vmul.f32 %v804, %v800
    %v807 = vsel %vm802, %v799, %v805
    %v808 = vsel %vm803, %v800, %v806
    %v809 = vrot.slane %v281, 1
    %811 = vmatpush.xpose.msra.mxu0 0.0
    %812 = vmatpush.xpose.msra.mxu0 0.0
    %813 = vmatpush.xpose.msra.mxu0 0.0
    %814 = vmatpush.xpose.msra.mxu0 0.0
    %815 = vmatpush.xpose.msra.mxu0 0.0
    %816 = vmatpush.xpose.msra.mxu0 0.0
    %817 = vmatpush.xpose.msra.mxu0 0.0
    %818 = vmatpush.xpose.msra.mxu0 0.0
    %819 = vmatpush.xpose.msra.mxu0 0.0
    %820 = vmatpush.xpose.msra.mxu0 0.0
    %821 = vmatpush.xpose.msra.mxu0 0.0
    %822 = vmatpush.xpose.msra.mxu0 0.0
    %823 = vmatpush.xpose.msra.mxu0 0.0
    %824 = vmatpush.xpose.msra.mxu0 0.0
    %825 = vmatpush.xpose.msra.mxu0 0.0
    %826 = vmatpush.xpose.msra.mxu0 %v411
    %827 = vmatmul.f32.gmra.mxu0 %v809
    %v828 = vpop.f32.mrf.mxu0
    %v829 = vadd.f32 0.0, %v828
    %830 = vdwg.mxu0
    %v831 = vperm.slane %v282, 1
    %v832 = vmul.f32 %v330, %v831
    %v833 = vmul.f32 %v331, %v831
    %834 = vadd.xlane.f32.xlu0 %v832
    %v835 = vpop.xlane.xlu0 %834
    %836 = vadd.xlane.f32.xlu0 %v833
    %v837 = vpop.xlane.xlu0 %836
    %v838 = vperm.slane %v829, 0
    %v839 = vadd.f32 %v835, %v838
    %v840 = vadd.f32 %v837, %v838
    %vm841 = vcmp.ge.f32.partialorder %v839, 0.0
    %vm842 = vcmp.ge.f32.partialorder %v840, 0.0
    %v843 = vmul.f32 %v839, 0.01
    %v844 = vmul.f32 %v840, 0.01
    %v845 = vsel %vm841, %v839, %v843
    %v846 = vsel %vm842, %v840, %v844
    %vm847 = vcmp.gt.f32.partialorder %v634, 0.0
    %vm848 = vcmp.gt.f32.partialorder %v635, 0.0
    %v849 = vsel %vm847, %v845, -1e+30
    %v850 = vsel %vm848, %v846, -1e+30
    %vm851 = vcmask 64512
    %v852 = vsel %vm851, %v849, -inf
    %853 = vmax.xlane.f32.xlu0 %v852
    %v854 = vpop.xlane.xlu0 %853
    %v855 = vsel %vm851, %v850, -inf
    %856 = vmax.xlane.f32.xlu0 %v855
    %v857 = vpop.xlane.xlu0 %856
    %v858 = vsub.f32 %v849, %v854
    %v859 = vsub.f32 %v850, %v857
    %v860 = vmul.f32 %v858, 1.442695
    %v861 = vpow.pop %v860
    %v862 = vmul.f32 %v859, 1.442695
    %v863 = vpow.pop %v862
    %v864 = vmul.f32 %v861, %v634
    %v865 = vmul.f32 %v863, %v635
    %v866 = vsel %vm851, %v864, 0.0
    %867 = vadd.xlane.f32.xlu0 %v866
    %v868 = vpop.xlane.xlu0 %867
    %v869 = vsel %vm851, %v865, 0.0
    %870 = vadd.xlane.f32.xlu0 %v869
    %v871 = vpop.xlane.xlu0 %870
    %vm872 = vcmp.eq.f32.partialorder %v868, 0.0
    %vm873 = vcmp.eq.f32.partialorder %v871, 0.0
    %v874 = vsel %vm872, 1.0, %v868
    %v875 = vsel %vm873, 1.0, %v871
    %v876 = vrcp.pop %v874
    %v877 = vmul.f32 %v874, %v876
    %v878 = vsub.f32 1.0, %v877
    %v879 = vmul.f32 %v876, %v878
    %v880 = vadd.f32 %v876, %v879
    %vm881 = vweird.f32 %v874
    %vm882 = vweird.f32 %v876
    %vm883 = vmor %vm881, %vm882
    %v884 = vsel %vm883, %v876, %v880
    %v885 = vand.u32 2147483647, %v874
    %vm886 = vcmp.eq.f32.partialorder %v885, 8.507059e+37
    %v887 = vand.u32 %v874, 2147483648
    %v888 = vor.u32 1.1754944e-38, %v887
    %v889 = vsel %vm886, %v888, %v884
    %v890 = vmul.f32 %v864, %v889
    %v891 = vrcp.pop %v875
    %v892 = vmul.f32 %v875, %v891
    %v893 = vsub.f32 1.0, %v892
    %v894 = vmul.f32 %v891, %v893
    %v895 = vadd.f32 %v891, %v894
    %vm896 = vweird.f32 %v875
    %vm897 = vweird.f32 %v891
    %vm898 = vmor %vm896, %vm897
    %v899 = vsel %vm898, %v891, %v895
    %v900 = vand.u32 2147483647, %v875
    %vm901 = vcmp.eq.f32.partialorder %v900, 8.507059e+37
    %v902 = vand.u32 %v875, 2147483648
    %v903 = vor.u32 1.1754944e-38, %v902
    %v904 = vsel %vm901, %v903, %v899
    %v905 = vmul.f32 %v865, %v904
    %v906 = vperm.slane %v283, 1
    %v908 = vsel %vm851, %v890, 0
    %v911 = vsel %vm851, %v905, 0
    %913 = vmatpush.msra.mxu0 0.0
    %914 = vmatpush.msra.mxu0 0.0
    %915 = vmatpush.msra.mxu0 0.0
    %916 = vmatpush.msra.mxu0 0.0
    %917 = vmatpush.msra.mxu0 0.0
    %918 = vmatpush.msra.mxu0 0.0
    %919 = vmatpush.msra.mxu0 0.0
    %920 = vmatpush.msra.mxu0 0.0
    %921 = vmatpush.msra.mxu0 0.0
    %922 = vmatpush.msra.mxu0 0.0
    %923 = vmatpush.msra.mxu0 0.0
    %924 = vmatpush.msra.mxu0 0.0
    %925 = vmatpush.msra.mxu0 0.0
    %926 = vmatpush.msra.mxu0 0.0
    %927 = vmatpush.msra.mxu0 0.0
    %928 = vmatpush.msra.mxu0 %v411
    %929 = vmatmul.f32.gmra.mxu0 %v908
    %v930 = vpop.f32.mrf.mxu0
    %v931 = vadd.f32 %v906, %v930
    %932 = vmatmul.f32.gmra.mxu0 %v911
    %v933 = vpop.f32.mrf.mxu0
    %v934 = vadd.f32 %v906, %v933
    %935 = vdwg.mxu0
    %v936 = vadd.f32 %v931, %v934
    %v937 = vrot.slane %v936, 4
    %v938 = vadd.f32 %v936, %v937
    %v939 = vrot.slane %v938, 2
    %v940 = vadd.f32 %v938, %v939
    %v941 = vrot.slane %v940, 1
    %v942 = vadd.f32 %v940, %v941
    %v943 = vmul.f32 %v942, %v591
    %v944 = vsub.f32 %v931, %v943
    %v945 = vsub.f32 %v934, %v943
    %v946 = vmul.f32 %v944, %v944
    %v947 = vmul.f32 %v945, %v945
    %v948 = vadd.f32 %v946, %v947
    %v949 = vrot.slane %v948, 4
    %v950 = vadd.f32 %v948, %v949
    %v951 = vrot.slane %v950, 2
    %v952 = vadd.f32 %v950, %v951
    %v953 = vrot.slane %v952, 1
    %v954 = vadd.f32 %v952, %v953
    %v955 = vmul.f32 %v954, %v591
    %v956 = vadd.f32 %v955, 1e-05
    %v957 = vrsqrt.pop %v956
    %v958 = vmul.f32 %v957, %v956
    %v959 = vmul.f32 %v958, %v957
    %v960 = vmul.f32 0.5, %v959
    %v961 = vsub.f32 1.5, %v960
    %v962 = vmul.f32 %v957, %v961
    %vm963 = vweird.f32 %v956
    %vm964 = vweird.f32 %v957
    %vm965 = vmor %vm963, %vm964
    %v966 = vsel %vm965, %v957, %v962
    %v967 = vmul.f32 %v944, %v966
    %v968 = vmul.f32 %v945, %v966
    %v969 = vperm.slane %v284, 1
    %v970 = vmul.f32 %v967, %v969
    %v971 = vmul.f32 %v968, %v969
    %v972 = vperm.slane %v285, 1
    %v973 = vadd.f32 %v970, %v972
    %v974 = vadd.f32 %v971, %v972
    %s975 = sld [smem:[#allocation24 + $0x1]]
    %vm976 = vcmp.ge.f32.partialorder %v973, 0.0
    %vm977 = vcmp.ge.f32.partialorder %v974, 0.0
    %v978 = vstv %s975
    %v979 = vmul.f32 %v978, %v973
    %v980 = vmul.f32 %v978, %v974
    %v981 = vsel %vm976, %v973, %v979
    %v982 = vsel %vm977, %v974, %v980
    %v983 = vrot.slane %v281, 2
    %985 = vmatpush.xpose.msra.mxu0 0.0
    %986 = vmatpush.xpose.msra.mxu0 0.0
    %987 = vmatpush.xpose.msra.mxu0 0.0
    %988 = vmatpush.xpose.msra.mxu0 0.0
    %989 = vmatpush.xpose.msra.mxu0 0.0
    %990 = vmatpush.xpose.msra.mxu0 0.0
    %991 = vmatpush.xpose.msra.mxu0 0.0
    %992 = vmatpush.xpose.msra.mxu0 0.0
    %993 = vmatpush.xpose.msra.mxu0 0.0
    %994 = vmatpush.xpose.msra.mxu0 0.0
    %995 = vmatpush.xpose.msra.mxu0 0.0
    %996 = vmatpush.xpose.msra.mxu0 0.0
    %997 = vmatpush.xpose.msra.mxu0 0.0
    %998 = vmatpush.xpose.msra.mxu0 0.0
    %999 = vmatpush.xpose.msra.mxu0 0.0
    %1000 = vmatpush.xpose.msra.mxu0 %v448
    %1001 = vmatmul.f32.gmra.mxu0 %v983
    %v1002 = vpop.f32.mrf.mxu0
    %v1003 = vadd.f32 0.0, %v1002
    %1004 = vdwg.mxu0
    %v1005 = vperm.slane %v282, 2
    %v1006 = vmul.f32 %v330, %v1005
    %v1007 = vmul.f32 %v331, %v1005
    %1008 = vadd.xlane.f32.xlu0 %v1006
    %v1009 = vpop.xlane.xlu0 %1008
    %1010 = vadd.xlane.f32.xlu0 %v1007
    %v1011 = vpop.xlane.xlu0 %1010
    %v1012 = vperm.slane %v1003, 0
    %v1013 = vadd.f32 %v1009, %v1012
    %v1014 = vadd.f32 %v1011, %v1012
    %vm1015 = vcmp.ge.f32.partialorder %v1013, 0.0
    %vm1016 = vcmp.ge.f32.partialorder %v1014, 0.0
    %v1017 = vmul.f32 %v1013, 0.01
    %v1018 = vmul.f32 %v1014, 0.01
    %v1019 = vsel %vm1015, %v1013, %v1017
    %v1020 = vsel %vm1016, %v1014, %v1018
    %vm1021 = vcmp.gt.f32.partialorder %v636, 0.0
    %vm1022 = vcmp.gt.f32.partialorder %v637, 0.0
    %v1023 = vsel %vm1021, %v1019, -1e+30
    %v1024 = vsel %vm1022, %v1020, -1e+30
    %v1025 = vsel %vm851, %v1023, -inf
    %1026 = vmax.xlane.f32.xlu0 %v1025
    %v1027 = vpop.xlane.xlu0 %1026
    %v1028 = vsel %vm851, %v1024, -inf
    %1029 = vmax.xlane.f32.xlu0 %v1028
    %v1030 = vpop.xlane.xlu0 %1029
    %v1031 = vsub.f32 %v1023, %v1027
    %v1032 = vsub.f32 %v1024, %v1030
    %v1033 = vmul.f32 %v1031, 1.442695
    %v1034 = vpow.pop %v1033
    %v1035 = vmul.f32 %v1032, 1.442695
    %v1036 = vpow.pop %v1035
    %v1037 = vmul.f32 %v1034, %v636
    %v1038 = vmul.f32 %v1036, %v637
    %v1039 = vsel %vm851, %v1037, 0.0
    %1040 = vadd.xlane.f32.xlu0 %v1039
    %v1041 = vpop.xlane.xlu0 %1040
    %v1042 = vsel %vm851, %v1038, 0.0
    %1043 = vadd.xlane.f32.xlu0 %v1042
    %v1044 = vpop.xlane.xlu0 %1043
    %vm1045 = vcmp.eq.f32.partialorder %v1041, 0.0
    %vm1046 = vcmp.eq.f32.partialorder %v1044, 0.0
    %v1047 = vsel %vm1045, 1.0, %v1041
    %v1048 = vsel %vm1046, 1.0, %v1044
    %v1049 = vrcp.pop %v1047
    %v1050 = vmul.f32 %v1047, %v1049
    %v1051 = vsub.f32 1.0, %v1050
    %v1052 = vmul.f32 %v1049, %v1051
    %v1053 = vadd.f32 %v1049, %v1052
    %vm1054 = vweird.f32 %v1047
    %vm1055 = vweird.f32 %v1049
    %vm1056 = vmor %vm1054, %vm1055
    %v1057 = vsel %vm1056, %v1049, %v1053
    %v1058 = vand.u32 2147483647, %v1047
    %vm1059 = vcmp.eq.f32.partialorder %v1058, 8.507059e+37
    %v1060 = vand.u32 %v1047, 2147483648
    %v1061 = vor.u32 1.1754944e-38, %v1060
    %v1062 = vsel %vm1059, %v1061, %v1057
    %v1063 = vmul.f32 %v1037, %v1062
    %v1064 = vrcp.pop %v1048
    %v1065 = vmul.f32 %v1048, %v1064
    %v1066 = vsub.f32 1.0, %v1065
    %v1067 = vmul.f32 %v1064, %v1066
    %v1068 = vadd.f32 %v1064, %v1067
    %vm1069 = vweird.f32 %v1048
    %vm1070 = vweird.f32 %v1064
    %vm1071 = vmor %vm1069, %vm1070
    %v1072 = vsel %vm1071, %v1064, %v1068
    %v1073 = vand.u32 2147483647, %v1048
    %vm1074 = vcmp.eq.f32.partialorder %v1073, 8.507059e+37
    %v1075 = vand.u32 %v1048, 2147483648
    %v1076 = vor.u32 1.1754944e-38, %v1075
    %v1077 = vsel %vm1074, %v1076, %v1072
    %v1078 = vmul.f32 %v1038, %v1077
    %v1079 = vperm.slane %v283, 2
    %v1081 = vsel %vm851, %v1063, 0
    %v1084 = vsel %vm851, %v1078, 0
    %1086 = vmatpush.msra.mxu0 0.0
    %1087 = vmatpush.msra.mxu0 0.0
    %1088 = vmatpush.msra.mxu0 0.0
    %1089 = vmatpush.msra.mxu0 0.0
    %1090 = vmatpush.msra.mxu0 0.0
    %1091 = vmatpush.msra.mxu0 0.0
    %1092 = vmatpush.msra.mxu0 0.0
    %1093 = vmatpush.msra.mxu0 0.0
    %1094 = vmatpush.msra.mxu0 0.0
    %1095 = vmatpush.msra.mxu0 0.0
    %1096 = vmatpush.msra.mxu0 0.0
    %1097 = vmatpush.msra.mxu0 0.0
    %1098 = vmatpush.msra.mxu0 0.0
    %1099 = vmatpush.msra.mxu0 0.0
    %1100 = vmatpush.msra.mxu0 0.0
    %1101 = vmatpush.msra.mxu0 %v448
    %1102 = vmatmul.f32.gmra.mxu0 %v1081
    %v1103 = vpop.f32.mrf.mxu0
    %v1104 = vadd.f32 %v1079, %v1103
    %1105 = vmatmul.f32.gmra.mxu0 %v1084
    %v1106 = vpop.f32.mrf.mxu0
    %v1107 = vadd.f32 %v1079, %v1106
    %1108 = vdwg.mxu0
    %v1109 = vadd.f32 %v1104, %v1107
    %v1110 = vrot.slane %v1109, 4
    %v1111 = vadd.f32 %v1109, %v1110
    %v1112 = vrot.slane %v1111, 2
    %v1113 = vadd.f32 %v1111, %v1112
    %v1114 = vrot.slane %v1113, 1
    %v1115 = vadd.f32 %v1113, %v1114
    %v1116 = vmul.f32 %v1115, %v591
    %v1117 = vsub.f32 %v1104, %v1116
    %v1118 = vsub.f32 %v1107, %v1116
    %v1119 = vmul.f32 %v1117, %v1117
    %v1120 = vmul.f32 %v1118, %v1118
    %v1121 = vadd.f32 %v1119, %v1120
    %v1122 = vrot.slane %v1121, 4
    %v1123 = vadd.f32 %v1121, %v1122
    %v1124 = vrot.slane %v1123, 2
    %v1125 = vadd.f32 %v1123, %v1124
    %v1126 = vrot.slane %v1125, 1
    %v1127 = vadd.f32 %v1125, %v1126
    %v1128 = vmul.f32 %v1127, %v591
    %v1129 = vadd.f32 %v1128, 1e-05
    %v1130 = vrsqrt.pop %v1129
    %v1131 = vmul.f32 %v1130, %v1129
    %v1132 = vmul.f32 %v1131, %v1130
    %v1133 = vmul.f32 0.5, %v1132
    %v1134 = vsub.f32 1.5, %v1133
    %v1135 = vmul.f32 %v1130, %v1134
    %vm1136 = vweird.f32 %v1129
    %vm1137 = vweird.f32 %v1130
    %vm1138 = vmor %vm1136, %vm1137
    %v1139 = vsel %vm1138, %v1130, %v1135
    %v1140 = vmul.f32 %v1117, %v1139
    %v1141 = vmul.f32 %v1118, %v1139
    %v1142 = vperm.slane %v284, 2
    %v1143 = vmul.f32 %v1140, %v1142
    %v1144 = vmul.f32 %v1141, %v1142
    %v1145 = vperm.slane %v285, 2
    %v1146 = vadd.f32 %v1143, %v1145
    %v1147 = vadd.f32 %v1144, %v1145
    %s1148 = sld [smem:[#allocation24 + $0x2]]
    %vm1149 = vcmp.ge.f32.partialorder %v1146, 0.0
    %vm1150 = vcmp.ge.f32.partialorder %v1147, 0.0
    %v1151 = vstv %s1148
    %v1152 = vmul.f32 %v1151, %v1146
    %v1153 = vmul.f32 %v1151, %v1147
    %v1154 = vsel %vm1149, %v1146, %v1152
    %v1155 = vsel %vm1150, %v1147, %v1153
    %v1156 = vsub.f32 1.0, %v286
    %v1157 = vsub.f32 1.0, %v287
    %v1158 = vadd.f32 %v807, %v1154
    %v1159 = vadd.f32 %v808, %v1155
    %v1160 = vmul.f32 %v835, %v1156
    %v1161 = vmul.f32 %v837, %v1157
    %1163 = vset.pattern.permute.xlu0 0
    %1164 = vperm.xlu0 %1163, %v1160
    %v1165 = vpop.permute.xlu0 %1164
    %1168 = vset.pattern.permute.xlu0 0
    %1169 = vperm.xlu0 %1168, %v1161
    %v1170 = vpop.permute.xlu0 %1169
    %v1172 = vadd.f32 %v1165, %v838
    %v1173 = vadd.f32 %v1170, %v838
    %vm1174 = vcmp.ge.f32.partialorder %v1172, 0.0
    %vm1175 = vcmp.ge.f32.partialorder %v1173, 0.0
    %v1176 = vmul.f32 %v1172, 0.01
    %v1177 = vmul.f32 %v1173, 0.01
    %v1178 = vsel %vm1174, %v1172, %v1176
    %v1179 = vsel %vm1175, %v1173, %v1177
    %v1180 = vsel %vm847, %v1178, -1e+30
    %v1181 = vsel %vm848, %v1179, -1e+30
    %v1182 = vsel %vm851, %v1180, -inf
    %1183 = vmax.xlane.f32.xlu0 %v1182
    %v1184 = vpop.xlane.xlu0 %1183
    %v1185 = vsel %vm851, %v1181, -inf
    %1186 = vmax.xlane.f32.xlu0 %v1185
    %v1187 = vpop.xlane.xlu0 %1186
    %v1188 = vsub.f32 %v1180, %v1184
    %v1189 = vsub.f32 %v1181, %v1187
    %v1190 = vmul.f32 %v1188, 1.442695
    %v1191 = vpow.pop %v1190
    %v1192 = vmul.f32 %v1189, 1.442695
    %v1193 = vpow.pop %v1192
    %v1194 = vmul.f32 %v1191, %v634
    %v1195 = vmul.f32 %v1193, %v635
    %v1196 = vsel %vm851, %v1194, 0.0
    %1197 = vadd.xlane.f32.xlu0 %v1196
    %v1198 = vpop.xlane.xlu0 %1197
    %v1199 = vsel %vm851, %v1195, 0.0
    %1200 = vadd.xlane.f32.xlu0 %v1199
    %v1201 = vpop.xlane.xlu0 %1200
    %vm1202 = vcmp.eq.f32.partialorder %v1198, 0.0
    %vm1203 = vcmp.eq.f32.partialorder %v1201, 0.0
    %v1204 = vsel %vm1202, 1.0, %v1198
    %v1205 = vsel %vm1203, 1.0, %v1201
    %v1206 = vrcp.pop %v1204
    %v1207 = vmul.f32 %v1204, %v1206
    %v1208 = vsub.f32 1.0, %v1207
    %v1209 = vmul.f32 %v1206, %v1208
    %v1210 = vadd.f32 %v1206, %v1209
    %vm1211 = vweird.f32 %v1204
    %vm1212 = vweird.f32 %v1206
    %vm1213 = vmor %vm1211, %vm1212
    %v1214 = vsel %vm1213, %v1206, %v1210
    %v1215 = vand.u32 2147483647, %v1204
    %vm1216 = vcmp.eq.f32.partialorder %v1215, 8.507059e+37
    %v1217 = vand.u32 %v1204, 2147483648
    %v1218 = vor.u32 1.1754944e-38, %v1217
    %v1219 = vsel %vm1216, %v1218, %v1214
    %v1220 = vmul.f32 %v1194, %v1219
    %v1221 = vrcp.pop %v1205
    %v1222 = vmul.f32 %v1205, %v1221
    %v1223 = vsub.f32 1.0, %v1222
    %v1224 = vmul.f32 %v1221, %v1223
    %v1225 = vadd.f32 %v1221, %v1224
    %vm1226 = vweird.f32 %v1205
    %vm1227 = vweird.f32 %v1221
    %vm1228 = vmor %vm1226, %vm1227
    %v1229 = vsel %vm1228, %v1221, %v1225
    %v1230 = vand.u32 2147483647, %v1205
    %vm1231 = vcmp.eq.f32.partialorder %v1230, 8.507059e+37
    %v1232 = vand.u32 %v1205, 2147483648
    %v1233 = vor.u32 1.1754944e-38, %v1232
    %v1234 = vsel %vm1231, %v1233, %v1229
    %v1235 = vmul.f32 %v1195, %v1234
    %v1237 = vsel %vm851, %v1220, 0
    %v1240 = vsel %vm851, %v1235, 0
    %1242 = vmatpush.msra.mxu0 0.0
    %1243 = vmatpush.msra.mxu0 0.0
    %1244 = vmatpush.msra.mxu0 0.0
    %1245 = vmatpush.msra.mxu0 0.0
    %1246 = vmatpush.msra.mxu0 0.0
    %1247 = vmatpush.msra.mxu0 0.0
    %1248 = vmatpush.msra.mxu0 0.0
    %1249 = vmatpush.msra.mxu0 0.0
    %1250 = vmatpush.msra.mxu0 0.0
    %1251 = vmatpush.msra.mxu0 0.0
    %1252 = vmatpush.msra.mxu0 0.0
    %1253 = vmatpush.msra.mxu0 0.0
    %1254 = vmatpush.msra.mxu0 0.0
    %1255 = vmatpush.msra.mxu0 0.0
    %1256 = vmatpush.msra.mxu0 0.0
    %1257 = vmatpush.msra.mxu0 %v411
    %1258 = vmatmul.f32.gmra.mxu0 %v1237
    %v1259 = vpop.f32.mrf.mxu0
    %v1260 = vadd.f32 %v906, %v1259
    %1261 = vmatmul.f32.gmra.mxu0 %v1240
    %v1262 = vpop.f32.mrf.mxu0
    %v1263 = vadd.f32 %v906, %v1262
    %1264 = vdwg.mxu0
    %v1265 = vadd.f32 %v1260, %v1263
    %v1266 = vrot.slane %v1265, 4
    %v1267 = vadd.f32 %v1265, %v1266
    %v1268 = vrot.slane %v1267, 2
    %v1269 = vadd.f32 %v1267, %v1268
    %v1270 = vrot.slane %v1269, 1
    %v1271 = vadd.f32 %v1269, %v1270
    %v1272 = vmul.f32 %v1271, %v591
    %v1273 = vsub.f32 %v1260, %v1272
    %v1274 = vsub.f32 %v1263, %v1272
    %v1275 = vmul.f32 %v1273, %v1273
    %v1276 = vmul.f32 %v1274, %v1274
    %v1277 = vadd.f32 %v1275, %v1276
    %v1278 = vrot.slane %v1277, 4
    %v1279 = vadd.f32 %v1277, %v1278
    %v1280 = vrot.slane %v1279, 2
    %v1281 = vadd.f32 %v1279, %v1280
    %v1282 = vrot.slane %v1281, 1
    %v1283 = vadd.f32 %v1281, %v1282
    %v1284 = vmul.f32 %v1283, %v591
    %v1285 = vadd.f32 %v1284, 1e-05
    %v1286 = vrsqrt.pop %v1285
    %v1287 = vmul.f32 %v1286, %v1285
    %v1288 = vmul.f32 %v1287, %v1286
    %v1289 = vmul.f32 0.5, %v1288
    %v1290 = vsub.f32 1.5, %v1289
    %v1291 = vmul.f32 %v1286, %v1290
    %vm1292 = vweird.f32 %v1285
    %vm1293 = vweird.f32 %v1286
    %vm1294 = vmor %vm1292, %vm1293
    %v1295 = vsel %vm1294, %v1286, %v1291
    %v1296 = vmul.f32 %v1273, %v1295
    %v1297 = vmul.f32 %v1274, %v1295
    %v1298 = vmul.f32 %v1296, %v969
    %v1299 = vmul.f32 %v1297, %v969
    %v1300 = vadd.f32 %v1298, %v972
    %v1301 = vadd.f32 %v1299, %v972
    %vm1302 = vcmp.ge.f32.partialorder %v1300, 0.0
    %vm1303 = vcmp.ge.f32.partialorder %v1301, 0.0
    %v1304 = vmul.f32 %v978, %v1300
    %v1305 = vmul.f32 %v978, %v1301
    %v1306 = vsel %vm1302, %v1300, %v1304
    %v1307 = vsel %vm1303, %v1301, %v1305
    %v1308 = vmul.f32 %v1306, %v1306
    %v1309 = vmul.f32 %v1307, %v1307
    %1310 = vadd.xlane.f32.xlu0 %v1308
    %v1311 = vpop.xlane.xlu0 %1310
    %1312 = vadd.xlane.f32.xlu0 %v1309
    %v1313 = vpop.xlane.xlu0 %1312
    %v1314 = vmax.f32 %v1311, 1e-24
    %v1315 = vmax.f32 %v1313, 1e-24
    %v1316 = vrsqrt.pop %v1314
    %v1317 = vmul.f32 %v1316, %v1314
    %v1318 = vmul.f32 %v1317, %v1316
    %v1319 = vmul.f32 0.5, %v1318
    %v1320 = vsub.f32 1.5, %v1319
    %v1321 = vmul.f32 %v1316, %v1320
    %vm1322 = vweird.f32 %v1314
    %vm1323 = vweird.f32 %v1316
    %vm1324 = vmor %vm1322, %vm1323
    %v1325 = vsel %vm1324, %v1316, %v1321
    %v1326 = vrsqrt.pop %v1315
    %v1327 = vmul.f32 %v1326, %v1315
    %v1328 = vmul.f32 %v1327, %v1326
    %v1329 = vmul.f32 0.5, %v1328
    %v1330 = vsub.f32 1.5, %v1329
    %v1331 = vmul.f32 %v1326, %v1330
    %vm1332 = vweird.f32 %v1315
    %vm1333 = vweird.f32 %v1326
    %vm1334 = vmor %vm1332, %vm1333
    %v1335 = vsel %vm1334, %v1326, %v1331
    %v1336 = vmul.f32 %v1306, %v1325
    %v1337 = vmul.f32 %v1307, %v1335
    %v1338 = vmul.f32 %v1158, %v1158
    %v1339 = vmul.f32 %v1159, %v1159
    %1340 = vadd.xlane.f32.xlu0 %v1338
    %v1341 = vpop.xlane.xlu0 %1340
    %1342 = vadd.xlane.f32.xlu0 %v1339
    %v1343 = vpop.xlane.xlu0 %1342
    %v1344 = vmax.f32 %v1341, 1e-24
    %v1345 = vmax.f32 %v1343, 1e-24
    %v1346 = vrsqrt.pop %v1344
    %v1347 = vmul.f32 %v1346, %v1344
    %v1348 = vmul.f32 %v1347, %v1346
    %v1349 = vmul.f32 0.5, %v1348
    %v1350 = vsub.f32 1.5, %v1349
    %v1351 = vmul.f32 %v1346, %v1350
    %vm1352 = vweird.f32 %v1344
    %vm1353 = vweird.f32 %v1346
    %vm1354 = vmor %vm1352, %vm1353
    %v1355 = vsel %vm1354, %v1346, %v1351
    %v1356 = vrsqrt.pop %v1345
    %v1357 = vmul.f32 %v1356, %v1345
    %v1358 = vmul.f32 %v1357, %v1356
    %v1359 = vmul.f32 0.5, %v1358
    %v1360 = vsub.f32 1.5, %v1359
    %v1361 = vmul.f32 %v1356, %v1360
    %vm1362 = vweird.f32 %v1345
    %vm1363 = vweird.f32 %v1356
    %vm1364 = vmor %vm1362, %vm1363
    %v1365 = vsel %vm1364, %v1356, %v1361
    %v1366 = vmul.f32 %v1158, %v1355
    %v1367 = vmul.f32 %v1159, %v1365
    %v1368 = vmul.f32 %v1336, %v1366
    %v1369 = vmul.f32 %v1337, %v1367
    %1370 = vadd.xlane.f32.xlu0 %v1368
    %v1371 = vpop.xlane.xlu0 %1370
    %1372 = vadd.xlane.f32.xlu0 %v1369
    %v1373 = vpop.xlane.xlu0 %1372
    %v1374 = vsub.f32 1.0, %v1371
    %v1375 = vsub.f32 1.0, %v1373
    %v1376 = vmul.f32 %v1374, %v286
    %v1377 = vmul.f32 %v1375, %v287
    %vm1378 = vcmask 7168
    %v1379 = vsel %vm1378, %v1376, 0.0
    %v1380 = vsel %vm1378, %v1377, 0.0
    %v1381 = vadd.f32 %v1379, %v1380
    %1382 = vadd.xlane.f32.xlu0 %v1381
    %v1383 = vpop.xlane.xlu0 %1382
    %v1384 = vrot.slane %v1383, 4
    %v1385 = vadd.f32 %v1383, %v1384
    %v1386 = vrot.slane %v1385, 2
    %v1387 = vadd.f32 %v1385, %v1386
    %v1388 = vrot.slane %v1387, 1
    %v1389 = vadd.f32 %v1387, %v1388
    %s1390 = vtos %v1389
    %s1391 = smul.f32 %s1390, 0.125
    %s1392 = sadd.f32 %s1391, 0.0
    %v1393 = vadd.f32 %v807, %v981
    %v1394 = vadd.f32 %v808, %v982
    %v1395 = vmul.f32 %v1009, %v1156
    %v1396 = vmul.f32 %v1011, %v1157
    %1398 = vset.pattern.permute.xlu0 1
    %1399 = vperm.xlu0 %1398, %v1395
    %v1400 = vpop.permute.xlu0 %1399
    %1403 = vset.pattern.permute.xlu0 1
    %1404 = vperm.xlu0 %1403, %v1396
    %v1405 = vpop.permute.xlu0 %1404
    %v1407 = vadd.f32 %v1400, %v1012
    %v1408 = vadd.f32 %v1405, %v1012
    %vm1409 = vcmp.ge.f32.partialorder %v1407, 0.0
    %vm1410 = vcmp.ge.f32.partialorder %v1408, 0.0
    %v1411 = vmul.f32 %v1407, 0.01
    %v1412 = vmul.f32 %v1408, 0.01
    %v1413 = vsel %vm1409, %v1407, %v1411
    %v1414 = vsel %vm1410, %v1408, %v1412
    %v1415 = vsel %vm1021, %v1413, -1e+30
    %v1416 = vsel %vm1022, %v1414, -1e+30
    %v1417 = vsel %vm851, %v1415, -inf
    %1418 = vmax.xlane.f32.xlu0 %v1417
    %v1419 = vpop.xlane.xlu0 %1418
    %v1420 = vsel %vm851, %v1416, -inf
    %1421 = vmax.xlane.f32.xlu0 %v1420
    %v1422 = vpop.xlane.xlu0 %1421
    %v1423 = vsub.f32 %v1415, %v1419
    %v1424 = vsub.f32 %v1416, %v1422
    %v1425 = vmul.f32 %v1423, 1.442695
    %v1426 = vpow.pop %v1425
    %v1427 = vmul.f32 %v1424, 1.442695
    %v1428 = vpow.pop %v1427
    %v1429 = vmul.f32 %v1426, %v636
    %v1430 = vmul.f32 %v1428, %v637
    %v1431 = vsel %vm851, %v1429, 0.0
    %1432 = vadd.xlane.f32.xlu0 %v1431
    %v1433 = vpop.xlane.xlu0 %1432
    %v1434 = vsel %vm851, %v1430, 0.0
    %1435 = vadd.xlane.f32.xlu0 %v1434
    %v1436 = vpop.xlane.xlu0 %1435
    %vm1437 = vcmp.eq.f32.partialorder %v1433, 0.0
    %vm1438 = vcmp.eq.f32.partialorder %v1436, 0.0
    %v1439 = vsel %vm1437, 1.0, %v1433
    %v1440 = vsel %vm1438, 1.0, %v1436
    %v1441 = vrcp.pop %v1439
    %v1442 = vmul.f32 %v1439, %v1441
    %v1443 = vsub.f32 1.0, %v1442
    %v1444 = vmul.f32 %v1441, %v1443
    %v1445 = vadd.f32 %v1441, %v1444
    %vm1446 = vweird.f32 %v1439
    %vm1447 = vweird.f32 %v1441
    %vm1448 = vmor %vm1446, %vm1447
    %v1449 = vsel %vm1448, %v1441, %v1445
    %v1450 = vand.u32 2147483647, %v1439
    %vm1451 = vcmp.eq.f32.partialorder %v1450, 8.507059e+37
    %v1452 = vand.u32 %v1439, 2147483648
    %v1453 = vor.u32 1.1754944e-38, %v1452
    %v1454 = vsel %vm1451, %v1453, %v1449
    %v1455 = vmul.f32 %v1429, %v1454
    %v1456 = vrcp.pop %v1440
    %v1457 = vmul.f32 %v1440, %v1456
    %v1458 = vsub.f32 1.0, %v1457
    %v1459 = vmul.f32 %v1456, %v1458
    %v1460 = vadd.f32 %v1456, %v1459
    %vm1461 = vweird.f32 %v1440
    %vm1462 = vweird.f32 %v1456
    %vm1463 = vmor %vm1461, %vm1462
    %v1464 = vsel %vm1463, %v1456, %v1460
    %v1465 = vand.u32 2147483647, %v1440
    %vm1466 = vcmp.eq.f32.partialorder %v1465, 8.507059e+37
    %v1467 = vand.u32 %v1440, 2147483648
    %v1468 = vor.u32 1.1754944e-38, %v1467
    %v1469 = vsel %vm1466, %v1468, %v1464
    %v1470 = vmul.f32 %v1430, %v1469
    %v1472 = vsel %vm851, %v1455, 0
    %v1475 = vsel %vm851, %v1470, 0
    %1477 = vmatpush.msra.mxu0 0.0
    %1478 = vmatpush.msra.mxu0 0.0
    %1479 = vmatpush.msra.mxu0 0.0
    %1480 = vmatpush.msra.mxu0 0.0
    %1481 = vmatpush.msra.mxu0 0.0
    %1482 = vmatpush.msra.mxu0 0.0
    %1483 = vmatpush.msra.mxu0 0.0
    %1484 = vmatpush.msra.mxu0 0.0
    %1485 = vmatpush.msra.mxu0 0.0
    %1486 = vmatpush.msra.mxu0 0.0
    %1487 = vmatpush.msra.mxu0 0.0
    %1488 = vmatpush.msra.mxu0 0.0
    %1489 = vmatpush.msra.mxu0 0.0
    %1490 = vmatpush.msra.mxu0 0.0
    %1491 = vmatpush.msra.mxu0 0.0
    %1492 = vmatpush.msra.mxu0 %v448
    %1493 = vmatmul.f32.gmra.mxu0 %v1472
    %v1494 = vpop.f32.mrf.mxu0
    %v1495 = vadd.f32 %v1079, %v1494
    %1496 = vmatmul.f32.gmra.mxu0 %v1475
    %v1497 = vpop.f32.mrf.mxu0
    %v1498 = vadd.f32 %v1079, %v1497
    %1499 = vdwg.mxu0
    %v1500 = vadd.f32 %v1495, %v1498
    %v1501 = vrot.slane %v1500, 4
    %v1502 = vadd.f32 %v1500, %v1501
    %v1503 = vrot.slane %v1502, 2
    %v1504 = vadd.f32 %v1502, %v1503
    %v1505 = vrot.slane %v1504, 1
    %v1506 = vadd.f32 %v1504, %v1505
    %v1507 = vmul.f32 %v1506, %v591
    %v1508 = vsub.f32 %v1495, %v1507
    %v1509 = vsub.f32 %v1498, %v1507
    %v1510 = vmul.f32 %v1508, %v1508
    %v1511 = vmul.f32 %v1509, %v1509
    %v1512 = vadd.f32 %v1510, %v1511
    %v1513 = vrot.slane %v1512, 4
    %v1514 = vadd.f32 %v1512, %v1513
    %v1515 = vrot.slane %v1514, 2
    %v1516 = vadd.f32 %v1514, %v1515
    %v1517 = vrot.slane %v1516, 1
    %v1518 = vadd.f32 %v1516, %v1517
    %v1519 = vmul.f32 %v1518, %v591
    %v1520 = vadd.f32 %v1519, 1e-05
    %v1521 = vrsqrt.pop %v1520
    %v1522 = vmul.f32 %v1521, %v1520
    %v1523 = vmul.f32 %v1522, %v1521
    %v1524 = vmul.f32 0.5, %v1523
    %v1525 = vsub.f32 1.5, %v1524
    %v1526 = vmul.f32 %v1521, %v1525
    %vm1527 = vweird.f32 %v1520
    %vm1528 = vweird.f32 %v1521
    %vm1529 = vmor %vm1527, %vm1528
    %v1530 = vsel %vm1529, %v1521, %v1526
    %v1531 = vmul.f32 %v1508, %v1530
    %v1532 = vmul.f32 %v1509, %v1530
    %v1533 = vmul.f32 %v1531, %v1142
    %v1534 = vmul.f32 %v1532, %v1142
    %v1535 = vadd.f32 %v1533, %v1145
    %v1536 = vadd.f32 %v1534, %v1145
    %vm1537 = vcmp.ge.f32.partialorder %v1535, 0.0
    %vm1538 = vcmp.ge.f32.partialorder %v1536, 0.0
    %v1539 = vmul.f32 %v1151, %v1535
    %v1540 = vmul.f32 %v1151, %v1536
    %v1541 = vsel %vm1537, %v1535, %v1539
    %v1542 = vsel %vm1538, %v1536, %v1540
    %v1543 = vmul.f32 %v1541, %v1541
    %v1544 = vmul.f32 %v1542, %v1542
    %1545 = vadd.xlane.f32.xlu0 %v1543
    %v1546 = vpop.xlane.xlu0 %1545
    %1547 = vadd.xlane.f32.xlu0 %v1544
    %v1548 = vpop.xlane.xlu0 %1547
    %v1549 = vmax.f32 %v1546, 1e-24
    %v1550 = vmax.f32 %v1548, 1e-24
    %v1551 = vrsqrt.pop %v1549
    %v1552 = vmul.f32 %v1551, %v1549
    %v1553 = vmul.f32 %v1552, %v1551
    %v1554 = vmul.f32 0.5, %v1553
    %v1555 = vsub.f32 1.5, %v1554
    %v1556 = vmul.f32 %v1551, %v1555
    %vm1557 = vweird.f32 %v1549
    %vm1558 = vweird.f32 %v1551
    %vm1559 = vmor %vm1557, %vm1558
    %v1560 = vsel %vm1559, %v1551, %v1556
    %v1561 = vrsqrt.pop %v1550
    %v1562 = vmul.f32 %v1561, %v1550
    %v1563 = vmul.f32 %v1562, %v1561
    %v1564 = vmul.f32 0.5, %v1563
    %v1565 = vsub.f32 1.5, %v1564
    %v1566 = vmul.f32 %v1561, %v1565
    %vm1567 = vweird.f32 %v1550
    %vm1568 = vweird.f32 %v1561
    %vm1569 = vmor %vm1567, %vm1568
    %v1570 = vsel %vm1569, %v1561, %v1566
    %v1571 = vmul.f32 %v1541, %v1560
    %v1572 = vmul.f32 %v1542, %v1570
    %v1573 = vmul.f32 %v1393, %v1393
    %v1574 = vmul.f32 %v1394, %v1394
    %1575 = vadd.xlane.f32.xlu0 %v1573
    %v1576 = vpop.xlane.xlu0 %1575
    %1577 = vadd.xlane.f32.xlu0 %v1574
    %v1578 = vpop.xlane.xlu0 %1577
    %v1579 = vmax.f32 %v1576, 1e-24
    %v1580 = vmax.f32 %v1578, 1e-24
    %v1581 = vrsqrt.pop %v1579
    %v1582 = vmul.f32 %v1581, %v1579
    %v1583 = vmul.f32 %v1582, %v1581
    %v1584 = vmul.f32 0.5, %v1583
    %v1585 = vsub.f32 1.5, %v1584
    %v1586 = vmul.f32 %v1581, %v1585
    %vm1587 = vweird.f32 %v1579
    %vm1588 = vweird.f32 %v1581
    %vm1589 = vmor %vm1587, %vm1588
    %v1590 = vsel %vm1589, %v1581, %v1586
    %v1591 = vrsqrt.pop %v1580
    %v1592 = vmul.f32 %v1591, %v1580
    %v1593 = vmul.f32 %v1592, %v1591
    %v1594 = vmul.f32 0.5, %v1593
    %v1595 = vsub.f32 1.5, %v1594
    %v1596 = vmul.f32 %v1591, %v1595
    %vm1597 = vweird.f32 %v1580
    %vm1598 = vweird.f32 %v1591
    %vm1599 = vmor %vm1597, %vm1598
    %v1600 = vsel %vm1599, %v1591, %v1596
    %v1601 = vmul.f32 %v1393, %v1590
    %v1602 = vmul.f32 %v1394, %v1600
    %v1603 = vmul.f32 %v1571, %v1601
    %v1604 = vmul.f32 %v1572, %v1602
    %1605 = vadd.xlane.f32.xlu0 %v1603
    %v1606 = vpop.xlane.xlu0 %1605
    %1607 = vadd.xlane.f32.xlu0 %v1604
    %v1608 = vpop.xlane.xlu0 %1607
    %v1609 = vsub.f32 1.0, %v1606
    %v1610 = vsub.f32 1.0, %v1608
    %v1611 = vmul.f32 %v1609, %v286
    %v1612 = vmul.f32 %v1610, %v287
    %1615 = vrot.lane.b32.xlu0 %v1611, 127
    %v1616 = vpop.permute.xlu0 %1615
    %1617 = vrot.lane.b32.xlu0 %v1612, 127
    %v1618 = vpop.permute.xlu0 %1617
    %v1621 = vsel %vm1378, %v1616, 0.0
    %v1622 = vsel %vm1378, %v1618, 0.0
    %v1623 = vadd.f32 %v1621, %v1622
    %1624 = vadd.xlane.f32.xlu0 %v1623
    %v1625 = vpop.xlane.xlu0 %1624
    %v1626 = vrot.slane %v1625, 4
    %v1627 = vadd.f32 %v1625, %v1626
    %v1628 = vrot.slane %v1627, 2
    %v1629 = vadd.f32 %v1627, %v1628
    %v1630 = vrot.slane %v1629, 1
    %v1631 = vadd.f32 %v1629, %v1630
    %s1632 = vtos %v1631
    %s1633 = smul.f32 %s1632, 0.125
    %s1634 = sadd.f32 %s1392, %s1633
    %v1635 = vadd.f32 %v981, %v1154
    %v1636 = vadd.f32 %v982, %v1155
    %v1637 = vmul.f32 %v662, %v1156
    %v1638 = vmul.f32 %v664, %v1157
    %1640 = vset.pattern.permute.xlu0 2
    %1641 = vperm.xlu0 %1640, %v1637
    %v1642 = vpop.permute.xlu0 %1641
    %1645 = vset.pattern.permute.xlu0 2
    %1646 = vperm.xlu0 %1645, %v1638
    %v1647 = vpop.permute.xlu0 %1646
    %v1649 = vadd.f32 %v1642, %v665
    %v1650 = vadd.f32 %v1647, %v665
    %vm1651 = vcmp.ge.f32.partialorder %v1649, 0.0
    %vm1652 = vcmp.ge.f32.partialorder %v1650, 0.0
    %v1653 = vmul.f32 %v1649, 0.01
    %v1654 = vmul.f32 %v1650, 0.01
    %v1655 = vsel %vm1651, %v1649, %v1653
    %v1656 = vsel %vm1652, %v1650, %v1654
    %v1657 = vsel %vm674, %v1655, -1e+30
    %v1658 = vsel %vm675, %v1656, -1e+30
    %v1659 = vsel %vm337, %v1657, -inf
    %1660 = vmax.xlane.f32.xlu0 %v1659
    %v1661 = vpop.xlane.xlu0 %1660
    %v1662 = vsel %vm337, %v1658, -inf
    %1663 = vmax.xlane.f32.xlu0 %v1662
    %v1664 = vpop.xlane.xlu0 %1663
    %v1665 = vsub.f32 %v1657, %v1661
    %v1666 = vsub.f32 %v1658, %v1664
    %v1667 = vmul.f32 %v1665, 1.442695
    %v1668 = vpow.pop %v1667
    %v1669 = vmul.f32 %v1666, 1.442695
    %v1670 = vpow.pop %v1669
    %v1671 = vmul.f32 %v1668, %v632
    %v1672 = vmul.f32 %v1670, %v633
    %v1673 = vsel %vm337, %v1671, 0.0
    %1674 = vadd.xlane.f32.xlu0 %v1673
    %v1675 = vpop.xlane.xlu0 %1674
    %v1676 = vsel %vm337, %v1672, 0.0
    %1677 = vadd.xlane.f32.xlu0 %v1676
    %v1678 = vpop.xlane.xlu0 %1677
    %vm1679 = vcmp.eq.f32.partialorder %v1675, 0.0
    %vm1680 = vcmp.eq.f32.partialorder %v1678, 0.0
    %v1681 = vsel %vm1679, 1.0, %v1675
    %v1682 = vsel %vm1680, 1.0, %v1678
    %v1683 = vrcp.pop %v1681
    %v1684 = vmul.f32 %v1681, %v1683
    %v1685 = vsub.f32 1.0, %v1684
    %v1686 = vmul.f32 %v1683, %v1685
    %v1687 = vadd.f32 %v1683, %v1686
    %vm1688 = vweird.f32 %v1681
    %vm1689 = vweird.f32 %v1683
    %vm1690 = vmor %vm1688, %vm1689
    %v1691 = vsel %vm1690, %v1683, %v1687
    %v1692 = vand.u32 2147483647, %v1681
    %vm1693 = vcmp.eq.f32.partialorder %v1692, 8.507059e+37
    %v1694 = vand.u32 %v1681, 2147483648
    %v1695 = vor.u32 1.1754944e-38, %v1694
    %v1696 = vsel %vm1693, %v1695, %v1691
    %v1697 = vmul.f32 %v1671, %v1696
    %v1698 = vrcp.pop %v1682
    %v1699 = vmul.f32 %v1682, %v1698
    %v1700 = vsub.f32 1.0, %v1699
    %v1701 = vmul.f32 %v1698, %v1700
    %v1702 = vadd.f32 %v1698, %v1701
    %vm1703 = vweird.f32 %v1682
    %vm1704 = vweird.f32 %v1698
    %vm1705 = vmor %vm1703, %vm1704
    %v1706 = vsel %vm1705, %v1698, %v1702
    %v1707 = vand.u32 2147483647, %v1682
    %vm1708 = vcmp.eq.f32.partialorder %v1707, 8.507059e+37
    %v1709 = vand.u32 %v1682, 2147483648
    %v1710 = vor.u32 1.1754944e-38, %v1709
    %v1711 = vsel %vm1708, %v1710, %v1706
    %v1712 = vmul.f32 %v1672, %v1711
    %v1714 = vsel %vm337, %v1697, 0
    %v1717 = vsel %vm337, %v1712, 0
    %1719 = vmatpush.msra.mxu0 0.0
    %1720 = vmatpush.msra.mxu0 0.0
    %1721 = vmatpush.msra.mxu0 0.0
    %1722 = vmatpush.msra.mxu0 0.0
    %1723 = vmatpush.msra.mxu0 0.0
    %1724 = vmatpush.msra.mxu0 0.0
    %1725 = vmatpush.msra.mxu0 0.0
    %1726 = vmatpush.msra.mxu0 0.0
    %1727 = vmatpush.msra.mxu0 0.0
    %1728 = vmatpush.msra.mxu0 0.0
    %1729 = vmatpush.msra.mxu0 0.0
    %1730 = vmatpush.msra.mxu0 0.0
    %1731 = vmatpush.msra.mxu0 0.0
    %1732 = vmatpush.msra.mxu0 0.0
    %1733 = vmatpush.msra.mxu0 %v631
    %1734 = vmatpush.msra.mxu0 %v630
    %1735 = vmatmul.f32.gmra.mxu0 %v1714
    %v1736 = vpop.f32.mrf.mxu0
    %v1737 = vadd.f32 %v732, %v1736
    %1738 = vmatmul.f32.gmra.mxu0 %v1717
    %v1739 = vpop.f32.mrf.mxu0
    %v1740 = vadd.f32 %v732, %v1739
    %1741 = vdwg.mxu0
    %v1742 = vadd.f32 %v1737, %v1740
    %v1743 = vrot.slane %v1742, 4
    %v1744 = vadd.f32 %v1742, %v1743
    %v1745 = vrot.slane %v1744, 2
    %v1746 = vadd.f32 %v1744, %v1745
    %v1747 = vrot.slane %v1746, 1
    %v1748 = vadd.f32 %v1746, %v1747
    %v1749 = vmul.f32 %v1748, %v591
    %v1750 = vsub.f32 %v1737, %v1749
    %v1751 = vsub.f32 %v1740, %v1749
    %v1752 = vmul.f32 %v1750, %v1750
    %v1753 = vmul.f32 %v1751, %v1751
    %v1754 = vadd.f32 %v1752, %v1753
    %v1755 = vrot.slane %v1754, 4
    %v1756 = vadd.f32 %v1754, %v1755
    %v1757 = vrot.slane %v1756, 2
    %v1758 = vadd.f32 %v1756, %v1757
    %v1759 = vrot.slane %v1758, 1
    %v1760 = vadd.f32 %v1758, %v1759
    %v1761 = vmul.f32 %v1760, %v591
    %v1762 = vadd.f32 %v1761, 1e-05
    %v1763 = vrsqrt.pop %v1762
    %v1764 = vmul.f32 %v1763, %v1762
    %v1765 = vmul.f32 %v1764, %v1763
    %v1766 = vmul.f32 0.5, %v1765
    %v1767 = vsub.f32 1.5, %v1766
    %v1768 = vmul.f32 %v1763, %v1767
    %vm1769 = vweird.f32 %v1762
    %vm1770 = vweird.f32 %v1763
    %vm1771 = vmor %vm1769, %vm1770
    %v1772 = vsel %vm1771, %v1763, %v1768
    %v1773 = vmul.f32 %v1750, %v1772
    %v1774 = vmul.f32 %v1751, %v1772
    %v1775 = vmul.f32 %v1773, %v795
    %v1776 = vmul.f32 %v1774, %v795
    %v1777 = vadd.f32 %v1775, %v798
    %v1778 = vadd.f32 %v1776, %v798
    %vm1779 = vcmp.ge.f32.partialorder %v1777, 0.0
    %vm1780 = vcmp.ge.f32.partialorder %v1778, 0.0
    %v1781 = vmul.f32 %v804, %v1777
    %v1782 = vmul.f32 %v804, %v1778
    %v1783 = vsel %vm1779, %v1777, %v1781
    %v1784 = vsel %vm1780, %v1778, %v1782
    %v1785 = vmul.f32 %v1783, %v1783
    %v1786 = vmul.f32 %v1784, %v1784
    %1787 = vadd.xlane.f32.xlu0 %v1785
    %v1788 = vpop.xlane.xlu0 %1787
    %1789 = vadd.xlane.f32.xlu0 %v1786
    %v1790 = vpop.xlane.xlu0 %1789
    %v1791 = vmax.f32 %v1788, 1e-24
    %v1792 = vmax.f32 %v1790, 1e-24
    %v1793 = vrsqrt.pop %v1791
    %v1794 = vmul.f32 %v1793, %v1791
    %v1795 = vmul.f32 %v1794, %v1793
    %v1796 = vmul.f32 0.5, %v1795
    %v1797 = vsub.f32 1.5, %v1796
    %v1798 = vmul.f32 %v1793, %v1797
    %vm1799 = vweird.f32 %v1791
    %vm1800 = vweird.f32 %v1793
    %vm1801 = vmor %vm1799, %vm1800
    %v1802 = vsel %vm1801, %v1793, %v1798
    %v1803 = vrsqrt.pop %v1792
    %v1804 = vmul.f32 %v1803, %v1792
    %v1805 = vmul.f32 %v1804, %v1803
    %v1806 = vmul.f32 0.5, %v1805
    %v1807 = vsub.f32 1.5, %v1806
    %v1808 = vmul.f32 %v1803, %v1807
    %vm1809 = vweird.f32 %v1792
    %vm1810 = vweird.f32 %v1803
    %vm1811 = vmor %vm1809, %vm1810
    %v1812 = vsel %vm1811, %v1803, %v1808
    %v1813 = vmul.f32 %v1783, %v1802
    %v1814 = vmul.f32 %v1784, %v1812
    %v1815 = vmul.f32 %v1635, %v1635
    %v1816 = vmul.f32 %v1636, %v1636
    %1817 = vadd.xlane.f32.xlu0 %v1815
    %v1818 = vpop.xlane.xlu0 %1817
    %1819 = vadd.xlane.f32.xlu0 %v1816
    %v1820 = vpop.xlane.xlu0 %1819
    %v1821 = vmax.f32 %v1818, 1e-24
    %v1822 = vmax.f32 %v1820, 1e-24
    %v1823 = vrsqrt.pop %v1821
    %v1824 = vmul.f32 %v1823, %v1821
    %v1825 = vmul.f32 %v1824, %v1823
    %v1826 = vmul.f32 0.5, %v1825
    %v1827 = vsub.f32 1.5, %v1826
    %v1828 = vmul.f32 %v1823, %v1827
    %vm1829 = vweird.f32 %v1821
    %vm1830 = vweird.f32 %v1823
    %vm1831 = vmor %vm1829, %vm1830
    %v1832 = vsel %vm1831, %v1823, %v1828
    %v1833 = vrsqrt.pop %v1822
    %v1834 = vmul.f32 %v1833, %v1822
    %v1835 = vmul.f32 %v1834, %v1833
    %v1836 = vmul.f32 0.5, %v1835
    %v1837 = vsub.f32 1.5, %v1836
    %v1838 = vmul.f32 %v1833, %v1837
    %vm1839 = vweird.f32 %v1822
    %vm1840 = vweird.f32 %v1833
    %vm1841 = vmor %vm1839, %vm1840
    %v1842 = vsel %vm1841, %v1833, %v1838
    %v1843 = vmul.f32 %v1635, %v1832
    %v1844 = vmul.f32 %v1636, %v1842
    %v1845 = vmul.f32 %v1813, %v1843
    %v1846 = vmul.f32 %v1814, %v1844
    %1847 = vadd.xlane.f32.xlu0 %v1845
    %v1848 = vpop.xlane.xlu0 %1847
    %1849 = vadd.xlane.f32.xlu0 %v1846
    %v1850 = vpop.xlane.xlu0 %1849
    %v1851 = vsub.f32 1.0, %v1848
    %v1852 = vsub.f32 1.0, %v1850
    %v1853 = vmul.f32 %v1851, %v286
    %v1854 = vmul.f32 %v1852, %v287
    %1857 = vrot.lane.b32.xlu0 %v1853, 126
    %v1858 = vpop.permute.xlu0 %1857
    %1859 = vrot.lane.b32.xlu0 %v1854, 126
    %v1860 = vpop.permute.xlu0 %1859
    %v1863 = vsel %vm1378, %v1858, 0.0
    %v1864 = vsel %vm1378, %v1860, 0.0
    %v1865 = vadd.f32 %v1863, %v1864
    %1866 = vadd.xlane.f32.xlu0 %v1865
    %v1867 = vpop.xlane.xlu0 %1866
    %v1868 = vrot.slane %v1867, 4
    %v1869 = vadd.f32 %v1867, %v1868
    %v1870 = vrot.slane %v1869, 2
    %v1871 = vadd.f32 %v1869, %v1870
    %v1872 = vrot.slane %v1871, 1
    %v1873 = vadd.f32 %v1871, %v1872
    %s1874 = vtos %v1873
    %s1875 = smul.f32 %s1874, 0.125
    %s1876 = sadd.f32 %s1634, %s1875
    %s1877 = scalar_lea.smem [#allocation27], 0
    %1878 = sst [smem:[%s1877]] %s1876
    // Predicated region
    $region146: #{tpu_custom_call.1} parent=1 // pred_check
      _
    $region147: #{tpu_custom_call.1} parent=1 // pred_check_branch
      %1880 = sbr.rel (0) target = $region149
    $region148: #{tpu_custom_call.1} parent=1 // pred_region
      %1882 = vsyncadd [#allocation5], 0
      %s1884 = sshll.u32 %s21, 4
      %s1885 = int_to_ptr.hbm [resolvable:$true] %s1884
      %1887 = dma.smem_to_hbm [#allocation27], 16, %s1885, [#allocation5]
    $region149: #{tpu_custom_call.1} parent=1 // pred_fallthru
      _
    // Predicated region
    $region150: #{tpu_custom_call.1} parent=1 // pred_check
      _
    $region151: #{tpu_custom_call.1} parent=1 // pred_check_branch
      %1889 = sbr.rel (0) target = $region153
    $region152: #{tpu_custom_call.1} parent=1 // pred_region
      %1891 = dma.done [#allocation5], 16
    $region153: #{tpu_custom_call.1} parent=1 // pred_fallthru
      _
    %1892 = sfence
    %1893 = vsyncpa [#allocation3], 1
    %1894 = vsyncpa [#allocation7], 1
    %1895 = vsyncpa [#allocation10], 1
    %1896 = vsyncpa [#allocation13], 1
    %1897 = vsyncpa [#allocation17], 1
    %1898 = vsyncpa [#allocation20], 1
    %1899 = vsyncpa [#allocation23], 1
    %1900 = vsyncpa [#allocation4], 1
    %1901 = vsyncpa [#allocation25], 1
    %1902 = vsyncpa [#allocation5], 1

</llo_original>
